<compile_context>
chip_gen: v7x
topology: tpu7x:2x2x1
jax: 0.10.0
libtpu: 0.0.40
codegen_flags: <defaults>
</compile_context>

<pallas_src>
import functools

import jax
import jax.numpy as jnp
import numpy as np
from jax.experimental import pallas as pl
from jax.experimental.pallas import tpu as pltpu

LANE = 128     # vreg lane width; also 4*hidden for both LSTMs in this config
L_MAX = 8      # fixed padding length for ragged image sequences (no recompiles)

_VMEM = pl.BlockSpec(memory_space=pltpu.MemorySpace.VMEM)


# ----------------------------------------------------------------------------
# Weight-slab layout (row offsets; every piece is 128 lanes wide, f32)
# ----------------------------------------------------------------------------
def _slab_offsets(img_h, h_dim):
    o = {}
    o["wih_img"] = 0                      # (LANE, LANE)  rows [0:img_in] real, rest 0
    o["whh_img"] = o["wih_img"] + LANE    # (img_h, LANE)
    o["wih_nlp"] = o["whh_img"] + img_h   # (LANE, LANE)  rows [0:in_dim] real, rest 0
    o["wih_imgp"] = o["wih_nlp"] + LANE   # (img_h, LANE)
    o["whh"] = o["wih_imgp"] + img_h      # (h_dim, LANE)
    o["bias"] = o["whh"] + h_dim          # 8 rows: [b_img, b_main, b_fc, 0, ...]
    o["wfc"] = o["bias"] + 8              # (h_dim, LANE)  fc column replicated per lane
    o["rows"] = o["wfc"] + h_dim
    return o


# ----------------------------------------------------------------------------
# Fused Pallas kernel
# ----------------------------------------------------------------------------
def _fused_lstm_kernel(w_ref, x_ref, out_ref, hs_ref, *, dims):
    T, L, _in_dim, _img_in, img_h, h_dim = dims
    off = _slab_offsets(img_h, h_dim)

    # ---- one-shot loads of weight tiles (values reused across all steps) ----
    wih_img = w_ref[off["wih_img"]:off["wih_img"] + LANE, :]
    whh_img = w_ref[off["whh_img"]:off["whh_img"] + img_h, :]
    wih_nlp = w_ref[off["wih_nlp"]:off["wih_nlp"] + LANE, :]
    wih_imgp = w_ref[off["wih_imgp"]:off["wih_imgp"] + img_h, :]
    whh = w_ref[off["whh"]:off["whh"] + h_dim, :]
    b_img = w_ref[off["bias"]:off["bias"] + 1, :]
    b_main = w_ref[off["bias"] + 1:off["bias"] + 2, :]
    b_fc = w_ref[off["bias"] + 2:off["bias"] + 3, :]
    w_fc = w_ref[off["wfc"]:off["wfc"] + h_dim, :]

    # ---- activation slab ----
    x_nlp = x_ref[0:T, :]                          # (T, 128)   zero-padded lanes
    x_img = x_ref[T:T + L * T, :]                  # (L*T, 128) time-major, zero-padded
    len_b = x_ref[T + L * T:T + (L + 1) * T, :]    # (T, 128)   image counts (f32) broadcast
    len_c = len_b[:, :img_h]                       # hoisted once; no per-step broadcast

    def cell(gates, c, Hg):
        # Gate columns are pre-permuted to [i, o, g, f] at prepare time.
        # Full-vreg activations: tanh-form sigmoid (1 EUP push, no divide) + tanh.
        sig = 0.5 * jnp.tanh(0.5 * gates) + 0.5
        tnh = jnp.tanh(gates)
        # Half-ring roll (blocks 0<->2, 1<->3) on the XLU; shift of 2*Hg lanes is
        # its own inverse, so the result is independent of rotate direction.
        tnh_sw = pltpu.roll(tnh, 2 * Hg, axis=1)
        i_g = sig[:, 0:Hg]            # block 0 — already lane-aligned
        g_g = tnh_sw[:, 0:Hg]         # block 2 -> lanes 0..Hg-1 via the roll
        f_g = sig[:, 3 * Hg:4 * Hg]   # block 3
        o_g = sig[:, Hg:2 * Hg]       # block 1 — off the c_new critical path
        c_new = f_g * c + i_g * g_g
        h_new = o_g * jnp.tanh(c_new)
        return h_new, c_new

    # ---- Phase 1: image LSTM, all T tweets batched along sublanes ------------
    pre_img = jnp.dot(x_img, wih_img, preferred_element_type=jnp.float32) + b_img
    h_img = jnp.zeros((T, img_h), jnp.float32)
    c_img = jnp.zeros((T, img_h), jnp.float32)
    for l in range(L):                              # short, static, unrolled
        gates = pre_img[l * T:(l + 1) * T, :] + jnp.dot(
            h_img, whh_img, preferred_element_type=jnp.float32)
        h_new, c_new = cell(gates, c_img, img_h)
        valid = len_c > float(l)                    # one full-width compare per step
        h_img = jnp.where(valid, h_new, h_img)
        c_img = jnp.where(valid, c_new, c_img)
    # h_img now holds the LAST valid hidden state of each tweet's image sequence.
    # TODO(synk): tweets with zero images keep h_img == 0 (PyTorch would error on [-1]).

    # ---- Phase 2: main LSTM over the T-step history (serial, batch = 1) ------
    pre_main = (jnp.dot(x_nlp, wih_nlp, preferred_element_type=jnp.float32)
                + jnp.dot(h_img, wih_imgp, preferred_element_type=jnp.float32)
                + b_main)                           # (T, 128)
    h = jnp.zeros((1, h_dim), jnp.float32)
    c = jnp.zeros((1, h_dim), jnp.float32)
    for t in range(T):                              # static, unrolled; h/c live in vregs
        gates = pre_main[t:t + 1, :] + jnp.dot(
            h, whh, preferred_element_type=jnp.float32)
        h, c = cell(gates, c, h_dim)
        hs_ref[t:t + 1, :] = h                      # plain row store into VMEM scratch

    # ---- Phase 3: fused FC + sigmoid, lane-dense (T,128) output store --------
    logits = jnp.dot(hs_ref[...], w_fc, preferred_element_type=jnp.float32) + b_fc
    out_ref[...] = 0.5 * jnp.tanh(0.5 * logits) + 0.5


# ----------------------------------------------------------------------------
# One-time parameter preparation: transpose / bias-sum / gate permutation /
# fc-column replication, packed into a single (rows, 128) f32 weight slab.
# ----------------------------------------------------------------------------
def _perm_gate_cols_np(m, H):
    """PyTorch gate-column order [i, f, g, o] -> kernel order [i, o, g, f]."""
    return np.concatenate(
        [m[:, 0 * H:1 * H], m[:, 3 * H:4 * H], m[:, 2 * H:3 * H], m[:, 1 * H:2 * H]],
        axis=1)


def prepare_params(params):
    img_h = int(params["img_w_hh"].shape[1])
    h_dim = int(params["w_hh"].shape[1])
    img_in = int(params["img_w_ih"].shape[1])
    in_dim = int(params["w_ih"].shape[1]) - img_h
    assert 4 * img_h == LANE and 4 * h_dim == LANE, "kernel assumes 4*hidden == 128"
    assert img_in <= LANE and in_dim <= LANE
    assert img_h % 8 == 0 and h_dim % 8 == 0

    off = _slab_offsets(img_h, h_dim)
    slab = np.zeros((off["rows"], LANE), np.float32)

    wih_img = _perm_gate_cols_np(np.asarray(params["img_w_ih"], np.float32).T, img_h)
    whh_img = _perm_gate_cols_np(np.asarray(params["img_w_hh"], np.float32).T, img_h)
    b_img = _perm_gate_cols_np(
        (np.asarray(params["img_b_ih"], np.float32)
         + np.asarray(params["img_b_hh"], np.float32)).reshape(1, -1), img_h)
    wih = _perm_gate_cols_np(np.asarray(params["w_ih"], np.float32).T, h_dim)
    whh = _perm_gate_cols_np(np.asarray(params["w_hh"], np.float32).T, h_dim)
    b_main = _perm_gate_cols_np(
        (np.asarray(params["b_ih"], np.float32)
         + np.asarray(params["b_hh"], np.float32)).reshape(1, -1), h_dim)
    w_fc = np.asarray(params["fc_w"], np.float32).reshape(1, h_dim)   # (1, H)
    b_fc = float(np.asarray(params["fc_b"], np.float32).reshape(()))

    slab[off["wih_img"]:off["wih_img"] + img_in, :] = wih_img
    slab[off["whh_img"]:off["whh_img"] + img_h, :] = whh_img
    slab[off["wih_nlp"]:off["wih_nlp"] + in_dim, :] = wih[:in_dim]
    slab[off["wih_imgp"]:off["wih_imgp"] + img_h, :] = wih[in_dim:]
    slab[off["whh"]:off["whh"] + h_dim, :] = whh
    slab[off["bias"] + 0, :] = b_img[0]
    slab[off["bias"] + 1, :] = b_main[0]
    slab[off["bias"] + 2, :] = b_fc
    slab[off["wfc"]:off["wfc"] + h_dim, :] = np.repeat(w_fc.T, LANE, axis=1)

    dims = (in_dim, img_in, img_h, h_dim)
    return jnp.asarray(slab), dims


# ----------------------------------------------------------------------------
# Per-call activation packing (host-side NumPy, single device transfer)
# ----------------------------------------------------------------------------
def build_activation_slab(X_i, X_i_images, l_max=L_MAX):
    """Rows [0,T): NLP features; rows [T, T+l_max*T): time-major padded image
    features; rows [T+l_max*T, T+(l_max+1)*T): per-tweet image counts broadcast
    across all 128 lanes (pre-built masks)."""
    X_i = np.asarray(X_i, np.float32)
    T, in_dim = int(X_i.shape[0]), int(X_i.shape[1])
    img_in = int(np.asarray(X_i_images[0]).shape[1])
    slab = np.zeros((T * (l_max + 2), LANE), np.float32)
    slab[:T, :in_dim] = X_i
    lengths = np.zeros((T, 1), np.float32)
    for j, xi in enumerate(X_i_images):
        xi = np.asarray(xi, np.float32)
        n = min(int(xi.shape[0]), l_max)
        lengths[j, 0] = n
        for l in range(n):
            slab[T + l * T + j, :img_in] = xi[l]   # time-major: row = T + l*T + j
    slab[T + l_max * T:, :] = lengths
    return jnp.asarray(slab), T, in_dim, img_in


# ----------------------------------------------------------------------------
# Wrappers
# ----------------------------------------------------------------------------
@functools.partial(jax.jit, static_argnums=(2,))
def _fused_forward(w_slab, act_slab, dims):
    T, _L, _in_dim, _img_in, _img_h, h_dim = dims
    out = pl.pallas_call(
        functools.partial(_fused_lstm_kernel, dims=dims),
        out_shape=jax.ShapeDtypeStruct((T, LANE), jnp.float32),
        in_specs=[_VMEM, _VMEM],
        out_specs=_VMEM,
        scratch_shapes=[pltpu.VMEM((T, h_dim), jnp.float32)],
    )(w_slab, act_slab)
    return out[:, 0]        # lane-dense store in-kernel; every lane holds the pred


def lstm_model_forward(w_slab, wdims, X_i, X_i_images, l_max=L_MAX):
    """Equivalent of LSTM.forward(X_i, X_i_images) -> (T,) predictions."""
    in_dim, img_in, img_h, h_dim = wdims
    act_slab, T, in_dim_x, img_in_x = build_activation_slab(X_i, X_i_images, l_max)
    assert in_dim_x == in_dim and img_in_x == img_in
    dims = (T, l_max, in_dim, img_in, img_h, h_dim)
    return _fused_forward(w_slab, act_slab, dims)


# ----------------------------------------------------------------------------
# Pure-JAX reference (correctness check only)
# ----------------------------------------------------------------------------
def _ref_lstm_sequence(x, w_ih, w_hh, b_ih, b_hh):
    H = w_hh.shape[1]

    def step(carry, x_t):
        h, c = carry
        gates = x_t @ w_ih.T + b_ih + h @ w_hh.T + b_hh
        i = jax.nn.sigmoid(gates[0:H])
        f = jax.nn.sigmoid(gates[H:2 * H])
        g = jnp.tanh(gates[2 * H:3 * H])
        o = jax.nn.sigmoid(gates[3 * H:4 * H])
        c = f * c + i * g
        h = o * jnp.tanh(c)
        return (h, c), h

    init = (jnp.zeros((H,), jnp.float32), jnp.zeros((H,), jnp.float32))
    _, hs = jax.lax.scan(step, init, x)
    return hs


def _ref_forward(params, X_i, X_i_images):
    combined = [
        _ref_lstm_sequence(img, params["img_w_ih"], params["img_w_hh"],
                           params["img_b_ih"], params["img_b_hh"])[-1]
        for img in X_i_images
    ]
    x = jnp.concatenate([X_i, jnp.stack(combined)], axis=1)
    hs = _ref_lstm_sequence(x, params["w_ih"], params["w_hh"],
                            params["b_ih"], params["b_hh"])
    return jax.nn.sigmoid(hs @ params["fc_w"].T + params["fc_b"]).reshape(-1)


# ----------------------------------------------------------------------------
# Deterministic parameter init (PyTorch-style uniform(-1/sqrt(H), 1/sqrt(H)))
# ----------------------------------------------------------------------------
def init_params(key, input_dim, hidden_dim, img_input_dim, img_hidden_dim):
    def u(k, shape, bound):
        return jax.random.uniform(k, shape, jnp.float32, -bound, bound)

    ks = jax.random.split(key, 11)
    kb_img = 1.0 / jnp.sqrt(img_hidden_dim)
    kb = 1.0 / jnp.sqrt(hidden_dim)
    main_in = input_dim + img_hidden_dim
    return {
        "img_w_ih": u(ks[0], (4 * img_hidden_dim, img_input_dim), kb_img),
        "img_w_hh": u(ks[1], (4 * img_hidden_dim, img_hidden_dim), kb_img),
        "img_b_ih": u(ks[2], (4 * img_hidden_dim,), kb_img),
        "img_b_hh": u(ks[3], (4 * img_hidden_dim,), kb_img),
        "w_ih": u(ks[4], (4 * hidden_dim, main_in), kb),
        "w_hh": u(ks[5], (4 * hidden_dim, hidden_dim), kb),
        "b_ih": u(ks[6], (4 * hidden_dim,), kb),
        "b_hh": u(ks[7], (4 * hidden_dim,), kb),
        "fc_w": u(ks[8], (1, hidden_dim), kb),
        "fc_b": u(ks[9], (1,), kb),
    }


# ----------------------------------------------------------------------------
# Main
# ----------------------------------------------------------------------------
if __name__ == "__main__":
    INPUT_DIM = 16        # NLP feature dim
    HIDDEN_DIM = 32       # main LSTM hidden (4H = 128 -> lane-dense gates)
    IMG_INPUT_DIM = 64    # image feature dim
    IMG_HIDDEN_DIM = 32   # image LSTM hidden (4H = 128)
    T = 8                 # history length (number of tweets)

    key = jax.random.PRNGKey(0)
    k_p, k_x, k_img = jax.random.split(key, 3)
    params = init_params(k_p, INPUT_DIM, HIDDEN_DIM, IMG_INPUT_DIM, IMG_HIDDEN_DIM)
    w_slab, wdims = prepare_params(params)    # one-time slab build (host side)

    # X_i: (T, input_dim); X_i_images: ragged list of (num_images_j, img_input_dim)
    X_i = jax.random.normal(k_x, (T, INPUT_DIM), jnp.float32)
    img_keys = jax.random.split(k_img, T)
    num_images = [1, 2, 3, 4, 2, 1, 3, 2]      # ragged image counts per tweet
    X_i_images = [
        jax.random.normal(img_keys[j], (num_images[j], IMG_INPUT_DIM), jnp.float32)
        for j in range(T)
    ]

    preds = lstm_model_forward(w_slab, wdims, X_i, X_i_images)
    preds = jax.block_until_ready(preds)

    ref = jax.block_until_ready(_ref_forward(params, X_i, X_i_images))
    assert preds.shape == (T,)
    assert jnp.allclose(preds, ref, atol=1e-3, rtol=1e-3), (preds, ref)

    print("KERNEL_OK")
</pallas_src>

<mosaic_0001>
module attributes {stable_mosaic.version = 11 : i64} {
  func.func @_fused_lstm_kernel(%arg0: memref<392x128xf32, #tpu.memory_space<vmem>>, %arg1: memref<80x128xf32, #tpu.memory_space<vmem>>, %arg2: memref<8x128xf32, #tpu.memory_space<vmem>>, %arg3: memref<8x32xf32, #tpu.memory_space<vmem>>) attributes {dimension_semantics = [], scalar_prefetch = 0 : i64, scratch_operands = 1 : i64, tpu.core_type = #tpu.core_type<tc>} {
    %c0 = arith.constant 0 : index
    %c0_0 = arith.constant 0 : index
    %0 = vector.load %arg0[%c0, %c0_0] : memref<392x128xf32, #tpu.memory_space<vmem>>, vector<128x128xf32>
    %c128 = arith.constant 128 : index
    %c0_1 = arith.constant 0 : index
    %1 = vector.load %arg0[%c128, %c0_1] : memref<392x128xf32, #tpu.memory_space<vmem>>, vector<32x128xf32>
    %c160 = arith.constant 160 : index
    %c0_2 = arith.constant 0 : index
    %2 = vector.load %arg0[%c160, %c0_2] : memref<392x128xf32, #tpu.memory_space<vmem>>, vector<128x128xf32>
    %c288 = arith.constant 288 : index
    %c0_3 = arith.constant 0 : index
    %3 = vector.load %arg0[%c288, %c0_3] : memref<392x128xf32, #tpu.memory_space<vmem>>, vector<32x128xf32>
    %c320 = arith.constant 320 : index
    %c0_4 = arith.constant 0 : index
    %4 = vector.load %arg0[%c320, %c0_4] : memref<392x128xf32, #tpu.memory_space<vmem>>, vector<32x128xf32>
    %c352 = arith.constant 352 : index
    %c0_5 = arith.constant 0 : index
    %5 = vector.load %arg0[%c352, %c0_5] : memref<392x128xf32, #tpu.memory_space<vmem>>, vector<1x128xf32>
    %c353 = arith.constant 353 : index
    %c0_6 = arith.constant 0 : index
    %6 = vector.load %arg0[%c353, %c0_6] : memref<392x128xf32, #tpu.memory_space<vmem>>, vector<1x128xf32>
    %c354 = arith.constant 354 : index
    %c0_7 = arith.constant 0 : index
    %7 = vector.load %arg0[%c354, %c0_7] : memref<392x128xf32, #tpu.memory_space<vmem>>, vector<1x128xf32>
    %c360 = arith.constant 360 : index
    %c0_8 = arith.constant 0 : index
    %8 = vector.load %arg0[%c360, %c0_8] : memref<392x128xf32, #tpu.memory_space<vmem>>, vector<32x128xf32>
    %c0_9 = arith.constant 0 : index
    %c0_10 = arith.constant 0 : index
    %9 = vector.load %arg1[%c0_9, %c0_10] : memref<80x128xf32, #tpu.memory_space<vmem>>, vector<8x128xf32>
    %c8 = arith.constant 8 : index
    %c0_11 = arith.constant 0 : index
    %10 = vector.load %arg1[%c8, %c0_11] : memref<80x128xf32, #tpu.memory_space<vmem>>, vector<64x128xf32>
    %c72 = arith.constant 72 : index
    %c0_12 = arith.constant 0 : index
    %11 = vector.load %arg1[%c72, %c0_12] : memref<80x128xf32, #tpu.memory_space<vmem>>, vector<8x128xf32>
    %12 = vector.extract_strided_slice %11 {offsets = [0, 0], sizes = [8, 32], strides = [1, 1]} : vector<8x128xf32> to vector<8x32xf32>
    %cst = arith.constant dense<0.000000e+00> : vector<64x128xf32>
    %13 = tpu.matmul %10, %0, %cst {dimension_numbers = #tpu.dot_dimension_numbers<[1], [0], [0], [1], [0, 0, 1, 1], [], []>} : vector<64x128xf32>, vector<128x128xf32>, vector<64x128xf32> -> vector<64x128xf32>
    %14 = vector.broadcast %5 : vector<1x128xf32> to vector<64x128xf32>
    %15 = arith.addf %13, %14 : vector<64x128xf32>
    %cst_13 = arith.constant 0.000000e+00 : f32
    %16 = vector.broadcast %cst_13 : f32 to vector<8x32xf32>
    %cst_14 = arith.constant 0.000000e+00 : f32
    %17 = vector.broadcast %cst_14 : f32 to vector<8x32xf32>
    %18 = vector.extract_strided_slice %15 {offsets = [0, 0], sizes = [8, 128], strides = [1, 1]} : vector<64x128xf32> to vector<8x128xf32>
    %cst_15 = arith.constant dense<0.000000e+00> : vector<8x128xf32>
    %19 = tpu.matmul %16, %1, %cst_15 {dimension_numbers = #tpu.dot_dimension_numbers<[1], [0], [0], [1], [0, 0, 1, 1], [], []>} : vector<8x32xf32>, vector<32x128xf32>, vector<8x128xf32> -> vector<8x128xf32>
    %20 = arith.addf %18, %19 : vector<8x128xf32>
    %cst_16 = arith.constant 5.000000e-01 : f32
    %21 = vector.broadcast %cst_16 : f32 to vector<8x128xf32>
    %22 = arith.mulf %21, %20 : vector<8x128xf32>
    %23 = math.tanh %22 : vector<8x128xf32>
    %cst_17 = arith.constant 5.000000e-01 : f32
    %24 = vector.broadcast %cst_17 : f32 to vector<8x128xf32>
    %25 = arith.mulf %24, %23 : vector<8x128xf32>
    %cst_18 = arith.constant 5.000000e-01 : f32
    %26 = vector.broadcast %cst_18 : f32 to vector<8x128xf32>
    %27 = arith.addf %25, %26 : vector<8x128xf32>
    %28 = math.tanh %20 : vector<8x128xf32>
    %c64_i32 = arith.constant 64 : i32
    %29 = tpu.dynamic_rotate %28 by %c64_i32 dim 1 : vector<8x128xf32>, i32 -> vector<8x128xf32>
    %30 = vector.extract_strided_slice %27 {offsets = [0, 0], sizes = [8, 32], strides = [1, 1]} : vector<8x128xf32> to vector<8x32xf32>
    %31 = vector.extract_strided_slice %29 {offsets = [0, 0], sizes = [8, 32], strides = [1, 1]} : vector<8x128xf32> to vector<8x32xf32>
    %32 = vector.extract_strided_slice %27 {offsets = [0, 96], sizes = [8, 32], strides = [1, 1]} : vector<8x128xf32> to vector<8x32xf32>
    %33 = vector.extract_strided_slice %27 {offsets = [0, 32], sizes = [8, 32], strides = [1, 1]} : vector<8x128xf32> to vector<8x32xf32>
    %34 = arith.mulf %32, %17 : vector<8x32xf32>
    %35 = arith.mulf %30, %31 : vector<8x32xf32>
    %36 = arith.addf %34, %35 : vector<8x32xf32>
    %37 = math.tanh %36 : vector<8x32xf32>
    %38 = arith.mulf %33, %37 : vector<8x32xf32>
    %cst_19 = arith.constant 0.000000e+00 : f32
    %39 = vector.broadcast %cst_19 : f32 to vector<8x32xf32>
    %40 = arith.cmpf ogt, %12, %39 : vector<8x32xf32>
    %41 = arith.select %40, %38, %16 : vector<8x32xi1>, vector<8x32xf32>
    %42 = arith.select %40, %36, %17 : vector<8x32xi1>, vector<8x32xf32>
    %43 = vector.extract_strided_slice %15 {offsets = [8, 0], sizes = [8, 128], strides = [1, 1]} : vector<64x128xf32> to vector<8x128xf32>
    %cst_20 = arith.constant dense<0.000000e+00> : vector<8x128xf32>
    %44 = tpu.matmul %41, %1, %cst_20 {dimension_numbers = #tpu.dot_dimension_numbers<[1], [0], [0], [1], [0, 0, 1, 1], [], []>} : vector<8x32xf32>, vector<32x128xf32>, vector<8x128xf32> -> vector<8x128xf32>
    %45 = arith.addf %43, %44 : vector<8x128xf32>
    %cst_21 = arith.constant 5.000000e-01 : f32
    %46 = vector.broadcast %cst_21 : f32 to vector<8x128xf32>
    %47 = arith.mulf %46, %45 : vector<8x128xf32>
    %48 = math.tanh %47 : vector<8x128xf32>
    %cst_22 = arith.constant 5.000000e-01 : f32
    %49 = vector.broadcast %cst_22 : f32 to vector<8x128xf32>
    %50 = arith.mulf %49, %48 : vector<8x128xf32>
    %cst_23 = arith.constant 5.000000e-01 : f32
    %51 = vector.broadcast %cst_23 : f32 to vector<8x128xf32>
    %52 = arith.addf %50, %51 : vector<8x128xf32>
    %53 = math.tanh %45 : vector<8x128xf32>
    %c64_i32_24 = arith.constant 64 : i32
    %54 = tpu.dynamic_rotate %53 by %c64_i32_24 dim 1 : vector<8x128xf32>, i32 -> vector<8x128xf32>
    %55 = vector.extract_strided_slice %52 {offsets = [0, 0], sizes = [8, 32], strides = [1, 1]} : vector<8x128xf32> to vector<8x32xf32>
    %56 = vector.extract_strided_slice %54 {offsets = [0, 0], sizes = [8, 32], strides = [1, 1]} : vector<8x128xf32> to vector<8x32xf32>
    %57 = vector.extract_strided_slice %52 {offsets = [0, 96], sizes = [8, 32], strides = [1, 1]} : vector<8x128xf32> to vector<8x32xf32>
    %58 = vector.extract_strided_slice %52 {offsets = [0, 32], sizes = [8, 32], strides = [1, 1]} : vector<8x128xf32> to vector<8x32xf32>
    %59 = arith.mulf %57, %42 : vector<8x32xf32>
    %60 = arith.mulf %55, %56 : vector<8x32xf32>
    %61 = arith.addf %59, %60 : vector<8x32xf32>
    %62 = math.tanh %61 : vector<8x32xf32>
    %63 = arith.mulf %58, %62 : vector<8x32xf32>
    %cst_25 = arith.constant 1.000000e+00 : f32
    %64 = vector.broadcast %cst_25 : f32 to vector<8x32xf32>
    %65 = arith.cmpf ogt, %12, %64 : vector<8x32xf32>
    %66 = arith.select %65, %63, %41 : vector<8x32xi1>, vector<8x32xf32>
    %67 = arith.select %65, %61, %42 : vector<8x32xi1>, vector<8x32xf32>
    %68 = vector.extract_strided_slice %15 {offsets = [16, 0], sizes = [8, 128], strides = [1, 1]} : vector<64x128xf32> to vector<8x128xf32>
    %cst_26 = arith.constant dense<0.000000e+00> : vector<8x128xf32>
    %69 = tpu.matmul %66, %1, %cst_26 {dimension_numbers = #tpu.dot_dimension_numbers<[1], [0], [0], [1], [0, 0, 1, 1], [], []>} : vector<8x32xf32>, vector<32x128xf32>, vector<8x128xf32> -> vector<8x128xf32>
    %70 = arith.addf %68, %69 : vector<8x128xf32>
    %cst_27 = arith.constant 5.000000e-01 : f32
    %71 = vector.broadcast %cst_27 : f32 to vector<8x128xf32>
    %72 = arith.mulf %71, %70 : vector<8x128xf32>
    %73 = math.tanh %72 : vector<8x128xf32>
    %cst_28 = arith.constant 5.000000e-01 : f32
    %74 = vector.broadcast %cst_28 : f32 to vector<8x128xf32>
    %75 = arith.mulf %74, %73 : vector<8x128xf32>
    %cst_29 = arith.constant 5.000000e-01 : f32
    %76 = vector.broadcast %cst_29 : f32 to vector<8x128xf32>
    %77 = arith.addf %75, %76 : vector<8x128xf32>
    %78 = math.tanh %70 : vector<8x128xf32>
    %c64_i32_30 = arith.constant 64 : i32
    %79 = tpu.dynamic_rotate %78 by %c64_i32_30 dim 1 : vector<8x128xf32>, i32 -> vector<8x128xf32>
    %80 = vector.extract_strided_slice %77 {offsets = [0, 0], sizes = [8, 32], strides = [1, 1]} : vector<8x128xf32> to vector<8x32xf32>
    %81 = vector.extract_strided_slice %79 {offsets = [0, 0], sizes = [8, 32], strides = [1, 1]} : vector<8x128xf32> to vector<8x32xf32>
    %82 = vector.extract_strided_slice %77 {offsets = [0, 96], sizes = [8, 32], strides = [1, 1]} : vector<8x128xf32> to vector<8x32xf32>
    %83 = vector.extract_strided_slice %77 {offsets = [0, 32], sizes = [8, 32], strides = [1, 1]} : vector<8x128xf32> to vector<8x32xf32>
    %84 = arith.mulf %82, %67 : vector<8x32xf32>
    %85 = arith.mulf %80, %81 : vector<8x32xf32>
    %86 = arith.addf %84, %85 : vector<8x32xf32>
    %87 = math.tanh %86 : vector<8x32xf32>
    %88 = arith.mulf %83, %87 : vector<8x32xf32>
    %cst_31 = arith.constant 2.000000e+00 : f32
    %89 = vector.broadcast %cst_31 : f32 to vector<8x32xf32>
    %90 = arith.cmpf ogt, %12, %89 : vector<8x32xf32>
    %91 = arith.select %90, %88, %66 : vector<8x32xi1>, vector<8x32xf32>
    %92 = arith.select %90, %86, %67 : vector<8x32xi1>, vector<8x32xf32>
    %93 = vector.extract_strided_slice %15 {offsets = [24, 0], sizes = [8, 128], strides = [1, 1]} : vector<64x128xf32> to vector<8x128xf32>
    %cst_32 = arith.constant dense<0.000000e+00> : vector<8x128xf32>
    %94 = tpu.matmul %91, %1, %cst_32 {dimension_numbers = #tpu.dot_dimension_numbers<[1], [0], [0], [1], [0, 0, 1, 1], [], []>} : vector<8x32xf32>, vector<32x128xf32>, vector<8x128xf32> -> vector<8x128xf32>
    %95 = arith.addf %93, %94 : vector<8x128xf32>
    %cst_33 = arith.constant 5.000000e-01 : f32
    %96 = vector.broadcast %cst_33 : f32 to vector<8x128xf32>
    %97 = arith.mulf %96, %95 : vector<8x128xf32>
    %98 = math.tanh %97 : vector<8x128xf32>
    %cst_34 = arith.constant 5.000000e-01 : f32
    %99 = vector.broadcast %cst_34 : f32 to vector<8x128xf32>
    %100 = arith.mulf %99, %98 : vector<8x128xf32>
    %cst_35 = arith.constant 5.000000e-01 : f32
    %101 = vector.broadcast %cst_35 : f32 to vector<8x128xf32>
    %102 = arith.addf %100, %101 : vector<8x128xf32>
    %103 = math.tanh %95 : vector<8x128xf32>
    %c64_i32_36 = arith.constant 64 : i32
    %104 = tpu.dynamic_rotate %103 by %c64_i32_36 dim 1 : vector<8x128xf32>, i32 -> vector<8x128xf32>
    %105 = vector.extract_strided_slice %102 {offsets = [0, 0], sizes = [8, 32], strides = [1, 1]} : vector<8x128xf32> to vector<8x32xf32>
    %106 = vector.extract_strided_slice %104 {offsets = [0, 0], sizes = [8, 32], strides = [1, 1]} : vector<8x128xf32> to vector<8x32xf32>
    %107 = vector.extract_strided_slice %102 {offsets = [0, 96], sizes = [8, 32], strides = [1, 1]} : vector<8x128xf32> to vector<8x32xf32>
    %108 = vector.extract_strided_slice %102 {offsets = [0, 32], sizes = [8, 32], strides = [1, 1]} : vector<8x128xf32> to vector<8x32xf32>
    %109 = arith.mulf %107, %92 : vector<8x32xf32>
    %110 = arith.mulf %105, %106 : vector<8x32xf32>
    %111 = arith.addf %109, %110 : vector<8x32xf32>
    %112 = math.tanh %111 : vector<8x32xf32>
    %113 = arith.mulf %108, %112 : vector<8x32xf32>
    %cst_37 = arith.constant 3.000000e+00 : f32
    %114 = vector.broadcast %cst_37 : f32 to vector<8x32xf32>
    %115 = arith.cmpf ogt, %12, %114 : vector<8x32xf32>
    %116 = arith.select %115, %113, %91 : vector<8x32xi1>, vector<8x32xf32>
    %117 = arith.select %115, %111, %92 : vector<8x32xi1>, vector<8x32xf32>
    %118 = vector.extract_strided_slice %15 {offsets = [32, 0], sizes = [8, 128], strides = [1, 1]} : vector<64x128xf32> to vector<8x128xf32>
    %cst_38 = arith.constant dense<0.000000e+00> : vector<8x128xf32>
    %119 = tpu.matmul %116, %1, %cst_38 {dimension_numbers = #tpu.dot_dimension_numbers<[1], [0], [0], [1], [0, 0, 1, 1], [], []>} : vector<8x32xf32>, vector<32x128xf32>, vector<8x128xf32> -> vector<8x128xf32>
    %120 = arith.addf %118, %119 : vector<8x128xf32>
    %cst_39 = arith.constant 5.000000e-01 : f32
    %121 = vector.broadcast %cst_39 : f32 to vector<8x128xf32>
    %122 = arith.mulf %121, %120 : vector<8x128xf32>
    %123 = math.tanh %122 : vector<8x128xf32>
    %cst_40 = arith.constant 5.000000e-01 : f32
    %124 = vector.broadcast %cst_40 : f32 to vector<8x128xf32>
    %125 = arith.mulf %124, %123 : vector<8x128xf32>
    %cst_41 = arith.constant 5.000000e-01 : f32
    %126 = vector.broadcast %cst_41 : f32 to vector<8x128xf32>
    %127 = arith.addf %125, %126 : vector<8x128xf32>
    %128 = math.tanh %120 : vector<8x128xf32>
    %c64_i32_42 = arith.constant 64 : i32
    %129 = tpu.dynamic_rotate %128 by %c64_i32_42 dim 1 : vector<8x128xf32>, i32 -> vector<8x128xf32>
    %130 = vector.extract_strided_slice %127 {offsets = [0, 0], sizes = [8, 32], strides = [1, 1]} : vector<8x128xf32> to vector<8x32xf32>
    %131 = vector.extract_strided_slice %129 {offsets = [0, 0], sizes = [8, 32], strides = [1, 1]} : vector<8x128xf32> to vector<8x32xf32>
    %132 = vector.extract_strided_slice %127 {offsets = [0, 96], sizes = [8, 32], strides = [1, 1]} : vector<8x128xf32> to vector<8x32xf32>
    %133 = vector.extract_strided_slice %127 {offsets = [0, 32], sizes = [8, 32], strides = [1, 1]} : vector<8x128xf32> to vector<8x32xf32>
    %134 = arith.mulf %132, %117 : vector<8x32xf32>
    %135 = arith.mulf %130, %131 : vector<8x32xf32>
    %136 = arith.addf %134, %135 : vector<8x32xf32>
    %137 = math.tanh %136 : vector<8x32xf32>
    %138 = arith.mulf %133, %137 : vector<8x32xf32>
    %cst_43 = arith.constant 4.000000e+00 : f32
    %139 = vector.broadcast %cst_43 : f32 to vector<8x32xf32>
    %140 = arith.cmpf ogt, %12, %139 : vector<8x32xf32>
    %141 = arith.select %140, %138, %116 : vector<8x32xi1>, vector<8x32xf32>
    %142 = arith.select %140, %136, %117 : vector<8x32xi1>, vector<8x32xf32>
    %143 = vector.extract_strided_slice %15 {offsets = [40, 0], sizes = [8, 128], strides = [1, 1]} : vector<64x128xf32> to vector<8x128xf32>
    %cst_44 = arith.constant dense<0.000000e+00> : vector<8x128xf32>
    %144 = tpu.matmul %141, %1, %cst_44 {dimension_numbers = #tpu.dot_dimension_numbers<[1], [0], [0], [1], [0, 0, 1, 1], [], []>} : vector<8x32xf32>, vector<32x128xf32>, vector<8x128xf32> -> vector<8x128xf32>
    %145 = arith.addf %143, %144 : vector<8x128xf32>
    %cst_45 = arith.constant 5.000000e-01 : f32
    %146 = vector.broadcast %cst_45 : f32 to vector<8x128xf32>
    %147 = arith.mulf %146, %145 : vector<8x128xf32>
    %148 = math.tanh %147 : vector<8x128xf32>
    %cst_46 = arith.constant 5.000000e-01 : f32
    %149 = vector.broadcast %cst_46 : f32 to vector<8x128xf32>
    %150 = arith.mulf %149, %148 : vector<8x128xf32>
    %cst_47 = arith.constant 5.000000e-01 : f32
    %151 = vector.broadcast %cst_47 : f32 to vector<8x128xf32>
    %152 = arith.addf %150, %151 : vector<8x128xf32>
    %153 = math.tanh %145 : vector<8x128xf32>
    %c64_i32_48 = arith.constant 64 : i32
    %154 = tpu.dynamic_rotate %153 by %c64_i32_48 dim 1 : vector<8x128xf32>, i32 -> vector<8x128xf32>
    %155 = vector.extract_strided_slice %152 {offsets = [0, 0], sizes = [8, 32], strides = [1, 1]} : vector<8x128xf32> to vector<8x32xf32>
    %156 = vector.extract_strided_slice %154 {offsets = [0, 0], sizes = [8, 32], strides = [1, 1]} : vector<8x128xf32> to vector<8x32xf32>
    %157 = vector.extract_strided_slice %152 {offsets = [0, 96], sizes = [8, 32], strides = [1, 1]} : vector<8x128xf32> to vector<8x32xf32>
    %158 = vector.extract_strided_slice %152 {offsets = [0, 32], sizes = [8, 32], strides = [1, 1]} : vector<8x128xf32> to vector<8x32xf32>
    %159 = arith.mulf %157, %142 : vector<8x32xf32>
    %160 = arith.mulf %155, %156 : vector<8x32xf32>
    %161 = arith.addf %159, %160 : vector<8x32xf32>
    %162 = math.tanh %161 : vector<8x32xf32>
    %163 = arith.mulf %158, %162 : vector<8x32xf32>
    %cst_49 = arith.constant 5.000000e+00 : f32
    %164 = vector.broadcast %cst_49 : f32 to vector<8x32xf32>
    %165 = arith.cmpf ogt, %12, %164 : vector<8x32xf32>
    %166 = arith.select %165, %163, %141 : vector<8x32xi1>, vector<8x32xf32>
    %167 = arith.select %165, %161, %142 : vector<8x32xi1>, vector<8x32xf32>
    %168 = vector.extract_strided_slice %15 {offsets = [48, 0], sizes = [8, 128], strides = [1, 1]} : vector<64x128xf32> to vector<8x128xf32>
    %cst_50 = arith.constant dense<0.000000e+00> : vector<8x128xf32>
    %169 = tpu.matmul %166, %1, %cst_50 {dimension_numbers = #tpu.dot_dimension_numbers<[1], [0], [0], [1], [0, 0, 1, 1], [], []>} : vector<8x32xf32>, vector<32x128xf32>, vector<8x128xf32> -> vector<8x128xf32>
    %170 = arith.addf %168, %169 : vector<8x128xf32>
    %cst_51 = arith.constant 5.000000e-01 : f32
    %171 = vector.broadcast %cst_51 : f32 to vector<8x128xf32>
    %172 = arith.mulf %171, %170 : vector<8x128xf32>
    %173 = math.tanh %172 : vector<8x128xf32>
    %cst_52 = arith.constant 5.000000e-01 : f32
    %174 = vector.broadcast %cst_52 : f32 to vector<8x128xf32>
    %175 = arith.mulf %174, %173 : vector<8x128xf32>
    %cst_53 = arith.constant 5.000000e-01 : f32
    %176 = vector.broadcast %cst_53 : f32 to vector<8x128xf32>
    %177 = arith.addf %175, %176 : vector<8x128xf32>
    %178 = math.tanh %170 : vector<8x128xf32>
    %c64_i32_54 = arith.constant 64 : i32
    %179 = tpu.dynamic_rotate %178 by %c64_i32_54 dim 1 : vector<8x128xf32>, i32 -> vector<8x128xf32>
    %180 = vector.extract_strided_slice %177 {offsets = [0, 0], sizes = [8, 32], strides = [1, 1]} : vector<8x128xf32> to vector<8x32xf32>
    %181 = vector.extract_strided_slice %179 {offsets = [0, 0], sizes = [8, 32], strides = [1, 1]} : vector<8x128xf32> to vector<8x32xf32>
    %182 = vector.extract_strided_slice %177 {offsets = [0, 96], sizes = [8, 32], strides = [1, 1]} : vector<8x128xf32> to vector<8x32xf32>
    %183 = vector.extract_strided_slice %177 {offsets = [0, 32], sizes = [8, 32], strides = [1, 1]} : vector<8x128xf32> to vector<8x32xf32>
    %184 = arith.mulf %182, %167 : vector<8x32xf32>
    %185 = arith.mulf %180, %181 : vector<8x32xf32>
    %186 = arith.addf %184, %185 : vector<8x32xf32>
    %187 = math.tanh %186 : vector<8x32xf32>
    %188 = arith.mulf %183, %187 : vector<8x32xf32>
    %cst_55 = arith.constant 6.000000e+00 : f32
    %189 = vector.broadcast %cst_55 : f32 to vector<8x32xf32>
    %190 = arith.cmpf ogt, %12, %189 : vector<8x32xf32>
    %191 = arith.select %190, %188, %166 : vector<8x32xi1>, vector<8x32xf32>
    %192 = arith.select %190, %186, %167 : vector<8x32xi1>, vector<8x32xf32>
    %193 = vector.extract_strided_slice %15 {offsets = [56, 0], sizes = [8, 128], strides = [1, 1]} : vector<64x128xf32> to vector<8x128xf32>
    %cst_56 = arith.constant dense<0.000000e+00> : vector<8x128xf32>
    %194 = tpu.matmul %191, %1, %cst_56 {dimension_numbers = #tpu.dot_dimension_numbers<[1], [0], [0], [1], [0, 0, 1, 1], [], []>} : vector<8x32xf32>, vector<32x128xf32>, vector<8x128xf32> -> vector<8x128xf32>
    %195 = arith.addf %193, %194 : vector<8x128xf32>
    %cst_57 = arith.constant 5.000000e-01 : f32
    %196 = vector.broadcast %cst_57 : f32 to vector<8x128xf32>
    %197 = arith.mulf %196, %195 : vector<8x128xf32>
    %198 = math.tanh %197 : vector<8x128xf32>
    %cst_58 = arith.constant 5.000000e-01 : f32
    %199 = vector.broadcast %cst_58 : f32 to vector<8x128xf32>
    %200 = arith.mulf %199, %198 : vector<8x128xf32>
    %cst_59 = arith.constant 5.000000e-01 : f32
    %201 = vector.broadcast %cst_59 : f32 to vector<8x128xf32>
    %202 = arith.addf %200, %201 : vector<8x128xf32>
    %203 = math.tanh %195 : vector<8x128xf32>
    %c64_i32_60 = arith.constant 64 : i32
    %204 = tpu.dynamic_rotate %203 by %c64_i32_60 dim 1 : vector<8x128xf32>, i32 -> vector<8x128xf32>
    %205 = vector.extract_strided_slice %202 {offsets = [0, 0], sizes = [8, 32], strides = [1, 1]} : vector<8x128xf32> to vector<8x32xf32>
    %206 = vector.extract_strided_slice %204 {offsets = [0, 0], sizes = [8, 32], strides = [1, 1]} : vector<8x128xf32> to vector<8x32xf32>
    %207 = vector.extract_strided_slice %202 {offsets = [0, 96], sizes = [8, 32], strides = [1, 1]} : vector<8x128xf32> to vector<8x32xf32>
    %208 = vector.extract_strided_slice %202 {offsets = [0, 32], sizes = [8, 32], strides = [1, 1]} : vector<8x128xf32> to vector<8x32xf32>
    %209 = arith.mulf %207, %192 : vector<8x32xf32>
    %210 = arith.mulf %205, %206 : vector<8x32xf32>
    %211 = arith.addf %209, %210 : vector<8x32xf32>
    %212 = math.tanh %211 : vector<8x32xf32>
    %213 = arith.mulf %208, %212 : vector<8x32xf32>
    %cst_61 = arith.constant 7.000000e+00 : f32
    %214 = vector.broadcast %cst_61 : f32 to vector<8x32xf32>
    %215 = arith.cmpf ogt, %12, %214 : vector<8x32xf32>
    %216 = arith.select %215, %213, %191 : vector<8x32xi1>, vector<8x32xf32>
    %cst_62 = arith.constant dense<0.000000e+00> : vector<8x128xf32>
    %217 = tpu.matmul %9, %2, %cst_62 {dimension_numbers = #tpu.dot_dimension_numbers<[1], [0], [0], [1], [0, 0, 1, 1], [], []>} : vector<8x128xf32>, vector<128x128xf32>, vector<8x128xf32> -> vector<8x128xf32>
    %cst_63 = arith.constant dense<0.000000e+00> : vector<8x128xf32>
    %218 = tpu.matmul %216, %3, %cst_63 {dimension_numbers = #tpu.dot_dimension_numbers<[1], [0], [0], [1], [0, 0, 1, 1], [], []>} : vector<8x32xf32>, vector<32x128xf32>, vector<8x128xf32> -> vector<8x128xf32>
    %219 = arith.addf %217, %218 : vector<8x128xf32>
    %220 = vector.broadcast %6 : vector<1x128xf32> to vector<8x128xf32>
    %221 = arith.addf %219, %220 : vector<8x128xf32>
    %cst_64 = arith.constant 0.000000e+00 : f32
    %222 = vector.broadcast %cst_64 : f32 to vector<1x32xf32>
    %cst_65 = arith.constant 0.000000e+00 : f32
    %223 = vector.broadcast %cst_65 : f32 to vector<1x32xf32>
    %224 = vector.extract_strided_slice %221 {offsets = [0, 0], sizes = [1, 128], strides = [1, 1]} : vector<8x128xf32> to vector<1x128xf32>
    %cst_66 = arith.constant dense<0.000000e+00> : vector<1x128xf32>
    %225 = tpu.matmul %222, %4, %cst_66 {dimension_numbers = #tpu.dot_dimension_numbers<[1], [0], [0], [1], [0, 0, 1, 1], [], []>} : vector<1x32xf32>, vector<32x128xf32>, vector<1x128xf32> -> vector<1x128xf32>
    %226 = arith.addf %224, %225 : vector<1x128xf32>
    %cst_67 = arith.constant 5.000000e-01 : f32
    %227 = vector.broadcast %cst_67 : f32 to vector<1x128xf32>
    %228 = arith.mulf %227, %226 : vector<1x128xf32>
    %229 = math.tanh %228 : vector<1x128xf32>
    %cst_68 = arith.constant 5.000000e-01 : f32
    %230 = vector.broadcast %cst_68 : f32 to vector<1x128xf32>
    %231 = arith.mulf %230, %229 : vector<1x128xf32>
    %cst_69 = arith.constant 5.000000e-01 : f32
    %232 = vector.broadcast %cst_69 : f32 to vector<1x128xf32>
    %233 = arith.addf %231, %232 : vector<1x128xf32>
    %234 = math.tanh %226 : vector<1x128xf32>
    %c64_i32_70 = arith.constant 64 : i32
    %235 = tpu.dynamic_rotate %234 by %c64_i32_70 dim 1 : vector<1x128xf32>, i32 -> vector<1x128xf32>
    %236 = vector.extract_strided_slice %233 {offsets = [0, 0], sizes = [1, 32], strides = [1, 1]} : vector<1x128xf32> to vector<1x32xf32>
    %237 = vector.extract_strided_slice %235 {offsets = [0, 0], sizes = [1, 32], strides = [1, 1]} : vector<1x128xf32> to vector<1x32xf32>
    %238 = vector.extract_strided_slice %233 {offsets = [0, 96], sizes = [1, 32], strides = [1, 1]} : vector<1x128xf32> to vector<1x32xf32>
    %239 = vector.extract_strided_slice %233 {offsets = [0, 32], sizes = [1, 32], strides = [1, 1]} : vector<1x128xf32> to vector<1x32xf32>
    %240 = arith.mulf %238, %223 : vector<1x32xf32>
    %241 = arith.mulf %236, %237 : vector<1x32xf32>
    %242 = arith.addf %240, %241 : vector<1x32xf32>
    %243 = math.tanh %242 : vector<1x32xf32>
    %244 = arith.mulf %239, %243 : vector<1x32xf32>
    %c0_71 = arith.constant 0 : index
    %c0_72 = arith.constant 0 : index
    %245 = vector.load %arg3[%c0_71, %c0_72] : memref<8x32xf32, #tpu.memory_space<vmem>>, vector<1x32xf32>
    tpu.vector_store %arg3[%c0_71, %c0_72], %244 {strides = array<i32>} : memref<8x32xf32, #tpu.memory_space<vmem>>, vector<1x32xf32>,
    %246 = vector.extract_strided_slice %221 {offsets = [1, 0], sizes = [1, 128], strides = [1, 1]} : vector<8x128xf32> to vector<1x128xf32>
    %cst_73 = arith.constant dense<0.000000e+00> : vector<1x128xf32>
    %247 = tpu.matmul %244, %4, %cst_73 {dimension_numbers = #tpu.dot_dimension_numbers<[1], [0], [0], [1], [0, 0, 1, 1], [], []>} : vector<1x32xf32>, vector<32x128xf32>, vector<1x128xf32> -> vector<1x128xf32>
    %248 = arith.addf %246, %247 : vector<1x128xf32>
    %cst_74 = arith.constant 5.000000e-01 : f32
    %249 = vector.broadcast %cst_74 : f32 to vector<1x128xf32>
    %250 = arith.mulf %249, %248 : vector<1x128xf32>
    %251 = math.tanh %250 : vector<1x128xf32>
    %cst_75 = arith.constant 5.000000e-01 : f32
    %252 = vector.broadcast %cst_75 : f32 to vector<1x128xf32>
    %253 = arith.mulf %252, %251 : vector<1x128xf32>
    %cst_76 = arith.constant 5.000000e-01 : f32
    %254 = vector.broadcast %cst_76 : f32 to vector<1x128xf32>
    %255 = arith.addf %253, %254 : vector<1x128xf32>
    %256 = math.tanh %248 : vector<1x128xf32>
    %c64_i32_77 = arith.constant 64 : i32
    %257 = tpu.dynamic_rotate %256 by %c64_i32_77 dim 1 : vector<1x128xf32>, i32 -> vector<1x128xf32>
    %258 = vector.extract_strided_slice %255 {offsets = [0, 0], sizes = [1, 32], strides = [1, 1]} : vector<1x128xf32> to vector<1x32xf32>
    %259 = vector.extract_strided_slice %257 {offsets = [0, 0], sizes = [1, 32], strides = [1, 1]} : vector<1x128xf32> to vector<1x32xf32>
    %260 = vector.extract_strided_slice %255 {offsets = [0, 96], sizes = [1, 32], strides = [1, 1]} : vector<1x128xf32> to vector<1x32xf32>
    %261 = vector.extract_strided_slice %255 {offsets = [0, 32], sizes = [1, 32], strides = [1, 1]} : vector<1x128xf32> to vector<1x32xf32>
    %262 = arith.mulf %260, %242 : vector<1x32xf32>
    %263 = arith.mulf %258, %259 : vector<1x32xf32>
    %264 = arith.addf %262, %263 : vector<1x32xf32>
    %265 = math.tanh %264 : vector<1x32xf32>
    %266 = arith.mulf %261, %265 : vector<1x32xf32>
    %c1 = arith.constant 1 : index
    %c0_78 = arith.constant 0 : index
    %267 = vector.load %arg3[%c1, %c0_78] : memref<8x32xf32, #tpu.memory_space<vmem>>, vector<1x32xf32>
    tpu.vector_store %arg3[%c1, %c0_78], %266 {strides = array<i32>} : memref<8x32xf32, #tpu.memory_space<vmem>>, vector<1x32xf32>,
    %268 = vector.extract_strided_slice %221 {offsets = [2, 0], sizes = [1, 128], strides = [1, 1]} : vector<8x128xf32> to vector<1x128xf32>
    %cst_79 = arith.constant dense<0.000000e+00> : vector<1x128xf32>
    %269 = tpu.matmul %266, %4, %cst_79 {dimension_numbers = #tpu.dot_dimension_numbers<[1], [0], [0], [1], [0, 0, 1, 1], [], []>} : vector<1x32xf32>, vector<32x128xf32>, vector<1x128xf32> -> vector<1x128xf32>
    %270 = arith.addf %268, %269 : vector<1x128xf32>
    %cst_80 = arith.constant 5.000000e-01 : f32
    %271 = vector.broadcast %cst_80 : f32 to vector<1x128xf32>
    %272 = arith.mulf %271, %270 : vector<1x128xf32>
    %273 = math.tanh %272 : vector<1x128xf32>
    %cst_81 = arith.constant 5.000000e-01 : f32
    %274 = vector.broadcast %cst_81 : f32 to vector<1x128xf32>
    %275 = arith.mulf %274, %273 : vector<1x128xf32>
    %cst_82 = arith.constant 5.000000e-01 : f32
    %276 = vector.broadcast %cst_82 : f32 to vector<1x128xf32>
    %277 = arith.addf %275, %276 : vector<1x128xf32>
    %278 = math.tanh %270 : vector<1x128xf32>
    %c64_i32_83 = arith.constant 64 : i32
    %279 = tpu.dynamic_rotate %278 by %c64_i32_83 dim 1 : vector<1x128xf32>, i32 -> vector<1x128xf32>
    %280 = vector.extract_strided_slice %277 {offsets = [0, 0], sizes = [1, 32], strides = [1, 1]} : vector<1x128xf32> to vector<1x32xf32>
    %281 = vector.extract_strided_slice %279 {offsets = [0, 0], sizes = [1, 32], strides = [1, 1]} : vector<1x128xf32> to vector<1x32xf32>
    %282 = vector.extract_strided_slice %277 {offsets = [0, 96], sizes = [1, 32], strides = [1, 1]} : vector<1x128xf32> to vector<1x32xf32>
    %283 = vector.extract_strided_slice %277 {offsets = [0, 32], sizes = [1, 32], strides = [1, 1]} : vector<1x128xf32> to vector<1x32xf32>
    %284 = arith.mulf %282, %264 : vector<1x32xf32>
    %285 = arith.mulf %280, %281 : vector<1x32xf32>
    %286 = arith.addf %284, %285 : vector<1x32xf32>
    %287 = math.tanh %286 : vector<1x32xf32>
    %288 = arith.mulf %283, %287 : vector<1x32xf32>
    %c2 = arith.constant 2 : index
    %c0_84 = arith.constant 0 : index
    %289 = vector.load %arg3[%c2, %c0_84] : memref<8x32xf32, #tpu.memory_space<vmem>>, vector<1x32xf32>
    tpu.vector_store %arg3[%c2, %c0_84], %288 {strides = array<i32>} : memref<8x32xf32, #tpu.memory_space<vmem>>, vector<1x32xf32>,
    %290 = vector.extract_strided_slice %221 {offsets = [3, 0], sizes = [1, 128], strides = [1, 1]} : vector<8x128xf32> to vector<1x128xf32>
    %cst_85 = arith.constant dense<0.000000e+00> : vector<1x128xf32>
    %291 = tpu.matmul %288, %4, %cst_85 {dimension_numbers = #tpu.dot_dimension_numbers<[1], [0], [0], [1], [0, 0, 1, 1], [], []>} : vector<1x32xf32>, vector<32x128xf32>, vector<1x128xf32> -> vector<1x128xf32>
    %292 = arith.addf %290, %291 : vector<1x128xf32>
    %cst_86 = arith.constant 5.000000e-01 : f32
    %293 = vector.broadcast %cst_86 : f32 to vector<1x128xf32>
    %294 = arith.mulf %293, %292 : vector<1x128xf32>
    %295 = math.tanh %294 : vector<1x128xf32>
    %cst_87 = arith.constant 5.000000e-01 : f32
    %296 = vector.broadcast %cst_87 : f32 to vector<1x128xf32>
    %297 = arith.mulf %296, %295 : vector<1x128xf32>
    %cst_88 = arith.constant 5.000000e-01 : f32
    %298 = vector.broadcast %cst_88 : f32 to vector<1x128xf32>
    %299 = arith.addf %297, %298 : vector<1x128xf32>
    %300 = math.tanh %292 : vector<1x128xf32>
    %c64_i32_89 = arith.constant 64 : i32
    %301 = tpu.dynamic_rotate %300 by %c64_i32_89 dim 1 : vector<1x128xf32>, i32 -> vector<1x128xf32>
    %302 = vector.extract_strided_slice %299 {offsets = [0, 0], sizes = [1, 32], strides = [1, 1]} : vector<1x128xf32> to vector<1x32xf32>
    %303 = vector.extract_strided_slice %301 {offsets = [0, 0], sizes = [1, 32], strides = [1, 1]} : vector<1x128xf32> to vector<1x32xf32>
    %304 = vector.extract_strided_slice %299 {offsets = [0, 96], sizes = [1, 32], strides = [1, 1]} : vector<1x128xf32> to vector<1x32xf32>
    %305 = vector.extract_strided_slice %299 {offsets = [0, 32], sizes = [1, 32], strides = [1, 1]} : vector<1x128xf32> to vector<1x32xf32>
    %306 = arith.mulf %304, %286 : vector<1x32xf32>
    %307 = arith.mulf %302, %303 : vector<1x32xf32>
    %308 = arith.addf %306, %307 : vector<1x32xf32>
    %309 = math.tanh %308 : vector<1x32xf32>
    %310 = arith.mulf %305, %309 : vector<1x32xf32>
    %c3 = arith.constant 3 : index
    %c0_90 = arith.constant 0 : index
    %311 = vector.load %arg3[%c3, %c0_90] : memref<8x32xf32, #tpu.memory_space<vmem>>, vector<1x32xf32>
    tpu.vector_store %arg3[%c3, %c0_90], %310 {strides = array<i32>} : memref<8x32xf32, #tpu.memory_space<vmem>>, vector<1x32xf32>,
    %312 = vector.extract_strided_slice %221 {offsets = [4, 0], sizes = [1, 128], strides = [1, 1]} : vector<8x128xf32> to vector<1x128xf32>
    %cst_91 = arith.constant dense<0.000000e+00> : vector<1x128xf32>
    %313 = tpu.matmul %310, %4, %cst_91 {dimension_numbers = #tpu.dot_dimension_numbers<[1], [0], [0], [1], [0, 0, 1, 1], [], []>} : vector<1x32xf32>, vector<32x128xf32>, vector<1x128xf32> -> vector<1x128xf32>
    %314 = arith.addf %312, %313 : vector<1x128xf32>
    %cst_92 = arith.constant 5.000000e-01 : f32
    %315 = vector.broadcast %cst_92 : f32 to vector<1x128xf32>
    %316 = arith.mulf %315, %314 : vector<1x128xf32>
    %317 = math.tanh %316 : vector<1x128xf32>
    %cst_93 = arith.constant 5.000000e-01 : f32
    %318 = vector.broadcast %cst_93 : f32 to vector<1x128xf32>
    %319 = arith.mulf %318, %317 : vector<1x128xf32>
    %cst_94 = arith.constant 5.000000e-01 : f32
    %320 = vector.broadcast %cst_94 : f32 to vector<1x128xf32>
    %321 = arith.addf %319, %320 : vector<1x128xf32>
    %322 = math.tanh %314 : vector<1x128xf32>
    %c64_i32_95 = arith.constant 64 : i32
    %323 = tpu.dynamic_rotate %322 by %c64_i32_95 dim 1 : vector<1x128xf32>, i32 -> vector<1x128xf32>
    %324 = vector.extract_strided_slice %321 {offsets = [0, 0], sizes = [1, 32], strides = [1, 1]} : vector<1x128xf32> to vector<1x32xf32>
    %325 = vector.extract_strided_slice %323 {offsets = [0, 0], sizes = [1, 32], strides = [1, 1]} : vector<1x128xf32> to vector<1x32xf32>
    %326 = vector.extract_strided_slice %321 {offsets = [0, 96], sizes = [1, 32], strides = [1, 1]} : vector<1x128xf32> to vector<1x32xf32>
    %327 = vector.extract_strided_slice %321 {offsets = [0, 32], sizes = [1, 32], strides = [1, 1]} : vector<1x128xf32> to vector<1x32xf32>
    %328 = arith.mulf %326, %308 : vector<1x32xf32>
    %329 = arith.mulf %324, %325 : vector<1x32xf32>
    %330 = arith.addf %328, %329 : vector<1x32xf32>
    %331 = math.tanh %330 : vector<1x32xf32>
    %332 = arith.mulf %327, %331 : vector<1x32xf32>
    %c4 = arith.constant 4 : index
    %c0_96 = arith.constant 0 : index
    %333 = vector.load %arg3[%c4, %c0_96] : memref<8x32xf32, #tpu.memory_space<vmem>>, vector<1x32xf32>
    tpu.vector_store %arg3[%c4, %c0_96], %332 {strides = array<i32>} : memref<8x32xf32, #tpu.memory_space<vmem>>, vector<1x32xf32>,
    %334 = vector.extract_strided_slice %221 {offsets = [5, 0], sizes = [1, 128], strides = [1, 1]} : vector<8x128xf32> to vector<1x128xf32>
    %cst_97 = arith.constant dense<0.000000e+00> : vector<1x128xf32>
    %335 = tpu.matmul %332, %4, %cst_97 {dimension_numbers = #tpu.dot_dimension_numbers<[1], [0], [0], [1], [0, 0, 1, 1], [], []>} : vector<1x32xf32>, vector<32x128xf32>, vector<1x128xf32> -> vector<1x128xf32>
    %336 = arith.addf %334, %335 : vector<1x128xf32>
    %cst_98 = arith.constant 5.000000e-01 : f32
    %337 = vector.broadcast %cst_98 : f32 to vector<1x128xf32>
    %338 = arith.mulf %337, %336 : vector<1x128xf32>
    %339 = math.tanh %338 : vector<1x128xf32>
    %cst_99 = arith.constant 5.000000e-01 : f32
    %340 = vector.broadcast %cst_99 : f32 to vector<1x128xf32>
    %341 = arith.mulf %340, %339 : vector<1x128xf32>
    %cst_100 = arith.constant 5.000000e-01 : f32
    %342 = vector.broadcast %cst_100 : f32 to vector<1x128xf32>
    %343 = arith.addf %341, %342 : vector<1x128xf32>
    %344 = math.tanh %336 : vector<1x128xf32>
    %c64_i32_101 = arith.constant 64 : i32
    %345 = tpu.dynamic_rotate %344 by %c64_i32_101 dim 1 : vector<1x128xf32>, i32 -> vector<1x128xf32>
    %346 = vector.extract_strided_slice %343 {offsets = [0, 0], sizes = [1, 32], strides = [1, 1]} : vector<1x128xf32> to vector<1x32xf32>
    %347 = vector.extract_strided_slice %345 {offsets = [0, 0], sizes = [1, 32], strides = [1, 1]} : vector<1x128xf32> to vector<1x32xf32>
    %348 = vector.extract_strided_slice %343 {offsets = [0, 96], sizes = [1, 32], strides = [1, 1]} : vector<1x128xf32> to vector<1x32xf32>
    %349 = vector.extract_strided_slice %343 {offsets = [0, 32], sizes = [1, 32], strides = [1, 1]} : vector<1x128xf32> to vector<1x32xf32>
    %350 = arith.mulf %348, %330 : vector<1x32xf32>
    %351 = arith.mulf %346, %347 : vector<1x32xf32>
    %352 = arith.addf %350, %351 : vector<1x32xf32>
    %353 = math.tanh %352 : vector<1x32xf32>
    %354 = arith.mulf %349, %353 : vector<1x32xf32>
    %c5 = arith.constant 5 : index
    %c0_102 = arith.constant 0 : index
    %355 = vector.load %arg3[%c5, %c0_102] : memref<8x32xf32, #tpu.memory_space<vmem>>, vector<1x32xf32>
    tpu.vector_store %arg3[%c5, %c0_102], %354 {strides = array<i32>} : memref<8x32xf32, #tpu.memory_space<vmem>>, vector<1x32xf32>,
    %356 = vector.extract_strided_slice %221 {offsets = [6, 0], sizes = [1, 128], strides = [1, 1]} : vector<8x128xf32> to vector<1x128xf32>
    %cst_103 = arith.constant dense<0.000000e+00> : vector<1x128xf32>
    %357 = tpu.matmul %354, %4, %cst_103 {dimension_numbers = #tpu.dot_dimension_numbers<[1], [0], [0], [1], [0, 0, 1, 1], [], []>} : vector<1x32xf32>, vector<32x128xf32>, vector<1x128xf32> -> vector<1x128xf32>
    %358 = arith.addf %356, %357 : vector<1x128xf32>
    %cst_104 = arith.constant 5.000000e-01 : f32
    %359 = vector.broadcast %cst_104 : f32 to vector<1x128xf32>
    %360 = arith.mulf %359, %358 : vector<1x128xf32>
    %361 = math.tanh %360 : vector<1x128xf32>
    %cst_105 = arith.constant 5.000000e-01 : f32
    %362 = vector.broadcast %cst_105 : f32 to vector<1x128xf32>
    %363 = arith.mulf %362, %361 : vector<1x128xf32>
    %cst_106 = arith.constant 5.000000e-01 : f32
    %364 = vector.broadcast %cst_106 : f32 to vector<1x128xf32>
    %365 = arith.addf %363, %364 : vector<1x128xf32>
    %366 = math.tanh %358 : vector<1x128xf32>
    %c64_i32_107 = arith.constant 64 : i32
    %367 = tpu.dynamic_rotate %366 by %c64_i32_107 dim 1 : vector<1x128xf32>, i32 -> vector<1x128xf32>
    %368 = vector.extract_strided_slice %365 {offsets = [0, 0], sizes = [1, 32], strides = [1, 1]} : vector<1x128xf32> to vector<1x32xf32>
    %369 = vector.extract_strided_slice %367 {offsets = [0, 0], sizes = [1, 32], strides = [1, 1]} : vector<1x128xf32> to vector<1x32xf32>
    %370 = vector.extract_strided_slice %365 {offsets = [0, 96], sizes = [1, 32], strides = [1, 1]} : vector<1x128xf32> to vector<1x32xf32>
    %371 = vector.extract_strided_slice %365 {offsets = [0, 32], sizes = [1, 32], strides = [1, 1]} : vector<1x128xf32> to vector<1x32xf32>
    %372 = arith.mulf %370, %352 : vector<1x32xf32>
    %373 = arith.mulf %368, %369 : vector<1x32xf32>
    %374 = arith.addf %372, %373 : vector<1x32xf32>
    %375 = math.tanh %374 : vector<1x32xf32>
    %376 = arith.mulf %371, %375 : vector<1x32xf32>
    %c6 = arith.constant 6 : index
    %c0_108 = arith.constant 0 : index
    %377 = vector.load %arg3[%c6, %c0_108] : memref<8x32xf32, #tpu.memory_space<vmem>>, vector<1x32xf32>
    tpu.vector_store %arg3[%c6, %c0_108], %376 {strides = array<i32>} : memref<8x32xf32, #tpu.memory_space<vmem>>, vector<1x32xf32>,
    %378 = vector.extract_strided_slice %221 {offsets = [7, 0], sizes = [1, 128], strides = [1, 1]} : vector<8x128xf32> to vector<1x128xf32>
    %cst_109 = arith.constant dense<0.000000e+00> : vector<1x128xf32>
    %379 = tpu.matmul %376, %4, %cst_109 {dimension_numbers = #tpu.dot_dimension_numbers<[1], [0], [0], [1], [0, 0, 1, 1], [], []>} : vector<1x32xf32>, vector<32x128xf32>, vector<1x128xf32> -> vector<1x128xf32>
    %380 = arith.addf %378, %379 : vector<1x128xf32>
    %cst_110 = arith.constant 5.000000e-01 : f32
    %381 = vector.broadcast %cst_110 : f32 to vector<1x128xf32>
    %382 = arith.mulf %381, %380 : vector<1x128xf32>
    %383 = math.tanh %382 : vector<1x128xf32>
    %cst_111 = arith.constant 5.000000e-01 : f32
    %384 = vector.broadcast %cst_111 : f32 to vector<1x128xf32>
    %385 = arith.mulf %384, %383 : vector<1x128xf32>
    %cst_112 = arith.constant 5.000000e-01 : f32
    %386 = vector.broadcast %cst_112 : f32 to vector<1x128xf32>
    %387 = arith.addf %385, %386 : vector<1x128xf32>
    %388 = math.tanh %380 : vector<1x128xf32>
    %c64_i32_113 = arith.constant 64 : i32
    %389 = tpu.dynamic_rotate %388 by %c64_i32_113 dim 1 : vector<1x128xf32>, i32 -> vector<1x128xf32>
    %390 = vector.extract_strided_slice %387 {offsets = [0, 0], sizes = [1, 32], strides = [1, 1]} : vector<1x128xf32> to vector<1x32xf32>
    %391 = vector.extract_strided_slice %389 {offsets = [0, 0], sizes = [1, 32], strides = [1, 1]} : vector<1x128xf32> to vector<1x32xf32>
    %392 = vector.extract_strided_slice %387 {offsets = [0, 96], sizes = [1, 32], strides = [1, 1]} : vector<1x128xf32> to vector<1x32xf32>
    %393 = vector.extract_strided_slice %387 {offsets = [0, 32], sizes = [1, 32], strides = [1, 1]} : vector<1x128xf32> to vector<1x32xf32>
    %394 = arith.mulf %392, %374 : vector<1x32xf32>
    %395 = arith.mulf %390, %391 : vector<1x32xf32>
    %396 = arith.addf %394, %395 : vector<1x32xf32>
    %397 = math.tanh %396 : vector<1x32xf32>
    %398 = arith.mulf %393, %397 : vector<1x32xf32>
    %c7 = arith.constant 7 : index
    %c0_114 = arith.constant 0 : index
    %399 = vector.load %arg3[%c7, %c0_114] : memref<8x32xf32, #tpu.memory_space<vmem>>, vector<1x32xf32>
    tpu.vector_store %arg3[%c7, %c0_114], %398 {strides = array<i32>} : memref<8x32xf32, #tpu.memory_space<vmem>>, vector<1x32xf32>,
    %c0_115 = arith.constant 0 : index
    %c0_116 = arith.constant 0 : index
    %400 = vector.load %arg3[%c0_115, %c0_116] : memref<8x32xf32, #tpu.memory_space<vmem>>, vector<8x32xf32>
    %cst_117 = arith.constant dense<0.000000e+00> : vector<8x128xf32>
    %401 = tpu.matmul %400, %8, %cst_117 {dimension_numbers = #tpu.dot_dimension_numbers<[1], [0], [0], [1], [0, 0, 1, 1], [], []>} : vector<8x32xf32>, vector<32x128xf32>, vector<8x128xf32> -> vector<8x128xf32>
    %402 = vector.broadcast %7 : vector<1x128xf32> to vector<8x128xf32>
    %403 = arith.addf %401, %402 : vector<8x128xf32>
    %cst_118 = arith.constant 5.000000e-01 : f32
    %404 = vector.broadcast %cst_118 : f32 to vector<8x128xf32>
    %405 = arith.mulf %404, %403 : vector<8x128xf32>
    %406 = math.tanh %405 : vector<8x128xf32>
    %cst_119 = arith.constant 5.000000e-01 : f32
    %407 = vector.broadcast %cst_119 : f32 to vector<8x128xf32>
    %408 = arith.mulf %407, %406 : vector<8x128xf32>
    %cst_120 = arith.constant 5.000000e-01 : f32
    %409 = vector.broadcast %cst_120 : f32 to vector<8x128xf32>
    %410 = arith.addf %408, %409 : vector<8x128xf32>
    %c0_121 = arith.constant 0 : index
    %c0_122 = arith.constant 0 : index
    %411 = vector.load %arg2[%c0_121, %c0_122] : memref<8x128xf32, #tpu.memory_space<vmem>>, vector<8x128xf32>
    tpu.vector_store %arg2[%c0_121, %c0_122], %410 {strides = array<i32>} : memref<8x128xf32, #tpu.memory_space<vmem>>, vector<8x128xf32>,
    return
  }
}

</mosaic_0001>

<llo_original>
// kernel: _fused_forward.1
$region0: #{_fused_forward.1}
  #allocation0 [shape = 'u32[]', space=smem, size = 0x4, offset = 0x4, fixed_abs, tag = 'smem constant byte address 0x4 - core index']
  #allocation1 [shape = 'u32[144,128]{1,0:T(1,128)}', space=vmem, size = 0x12000, scoped, tag = 'internal scratch']
  #allocation2 [shape = 'f32[8,32]{1,0:T(8,128)}', space=vmem, size = 0x1000, scoped, tag = 'scratch operand']
  %s0 = inlined_call_operand.hbm [shape: f32[392,128], index: 0, kind: input, shape index: {}]
  %s1 = inlined_call_operand.hbm [shape: f32[80,128], index: 1, kind: input, shape index: {}]
  %s2 = inlined_call_operand.vmem [shape: f32[8,128], index: 2, kind: output, shape index: {}]
  %s3 = sld [smem:[#allocation0]]
  $region26: #{_fused_forward.1} parent=0
    _
  %s5 = ssub.s32 1, %s3
  %s6 = scalar_select 0, %s5, %s3
  $region1: #{_fused_forward.1} parent=0
    #allocation3 [shape = 'u8[200704]{0}', space=vmem, size = 0x31000, scoped, tag = 'input window, operand 0, single buffered']
    #allocation4 [shape = 's32[1]{0}', space=sflag, size = 0x4, scoped, tag = 'scoped memory for _fused_forward.1']
    #allocation5 [shape = 'u8[40960]{0}', space=vmem, size = 0xa000, scoped, tag = 'input window, operand 1, single buffered']
    #allocation6 [shape = 's32[1]{0}', space=sflag, size = 0x4, scoped, tag = 'scoped memory for _fused_forward.1']
    %7 = vsyncpa [#allocation4], 0
    %8 = vsyncpa [#allocation6], 0
    // Predicated region
    $region2: #{_fused_forward.1} parent=1 // pred_check
      _
    $region3: #{_fused_forward.1} parent=1 // pred_check_branch
      %10 = sbr.rel (0) target = $region5
    $region4: #{_fused_forward.1} parent=1 // pred_region
      %s12 = ssub.s32 6272, 6272
      %13 = vsyncadd [#allocation4], %s12
      %s14 = sshll.u32 [#allocation3], 4
      %s15 = int_to_ptr.vmem [resolvable:$true] %s14
      %20 = dma.hbm_to_vmem [thread:$0]  %s0, 6272, %s15, [#allocation4], 128, 128, 8
    $region5: #{_fused_forward.1} parent=1 // pred_fallthru
      _
    // Predicated region
    $region6: #{_fused_forward.1} parent=1 // pred_check
      _
    $region7: #{_fused_forward.1} parent=1 // pred_check_branch
      %22 = sbr.rel (0) target = $region9
    $region8: #{_fused_forward.1} parent=1 // pred_region
      %s24 = ssub.s32 1280, 1280
      %25 = vsyncadd [#allocation6], %s24
      %s26 = sshll.u32 [#allocation5], 4
      %s27 = int_to_ptr.vmem [resolvable:$true] %s26
      %32 = dma.hbm_to_vmem [thread:$0]  %s1, 1280, %s27, [#allocation6], 128, 128, 8
    $region9: #{_fused_forward.1} parent=1 // pred_fallthru
      _
    // Predicated region
    $region10: #{_fused_forward.1} parent=1 // pred_check
      _
    $region11: #{_fused_forward.1} parent=1 // pred_check_branch
      %34 = sbr.rel (0) target = $region13
    $region12: #{_fused_forward.1} parent=1 // pred_region
      %35 = dma.done [#allocation4], 6272
    $region13: #{_fused_forward.1} parent=1 // pred_fallthru
      _
    // Predicated region
    $region14: #{_fused_forward.1} parent=1 // pred_check
      _
    $region15: #{_fused_forward.1} parent=1 // pred_check_branch
      %37 = sbr.rel (0) target = $region17
    $region16: #{_fused_forward.1} parent=1 // pred_region
      %38 = dma.done [#allocation6], 1280
    $region17: #{_fused_forward.1} parent=1 // pred_fallthru
      _
    %v39 = vld [vmem:[#allocation3] sm:$0xff]
    %v40 = vld [vmem:[#allocation3 + $0x8] sm:$0xff]
    %v41 = vld [vmem:[#allocation3 + $0x10] sm:$0xff]
    %v42 = vld [vmem:[#allocation3 + $0x18] sm:$0xff]
    %v43 = vld [vmem:[#allocation3 + $0x20] sm:$0xff]
    %v44 = vld [vmem:[#allocation3 + $0x28] sm:$0xff]
    %v45 = vld [vmem:[#allocation3 + $0x30] sm:$0xff]
    %v46 = vld [vmem:[#allocation3 + $0x38] sm:$0xff]
    %v47 = vld [vmem:[#allocation3 + $0x40] sm:$0xff]
    %v48 = vld [vmem:[#allocation3 + $0x48] sm:$0xff]
    %v49 = vld [vmem:[#allocation3 + $0x50] sm:$0xff]
    %v50 = vld [vmem:[#allocation3 + $0x58] sm:$0xff]
    %v51 = vld [vmem:[#allocation3 + $0x60] sm:$0xff]
    %v52 = vld [vmem:[#allocation3 + $0x68] sm:$0xff]
    %v53 = vld [vmem:[#allocation3 + $0x70] sm:$0xff]
    %v54 = vld [vmem:[#allocation3 + $0x78] sm:$0xff]
    %v55 = vld [vmem:[#allocation3 + $0x80] sm:$0xff]
    %v56 = vld [vmem:[#allocation3 + $0x88] sm:$0xff]
    %v57 = vld [vmem:[#allocation3 + $0x90] sm:$0xff]
    %v58 = vld [vmem:[#allocation3 + $0x98] sm:$0xff]
    %v59 = vld [vmem:[#allocation3 + $0xa0] sm:$0xff]
    %v60 = vld [vmem:[#allocation3 + $0xa8] sm:$0xff]
    %v61 = vld [vmem:[#allocation3 + $0xb0] sm:$0xff]
    %v62 = vld [vmem:[#allocation3 + $0xb8] sm:$0xff]
    %v63 = vld [vmem:[#allocation3 + $0xc0] sm:$0xff]
    %v64 = vld [vmem:[#allocation3 + $0xc8] sm:$0xff]
    %v65 = vld [vmem:[#allocation3 + $0xd0] sm:$0xff]
    %v66 = vld [vmem:[#allocation3 + $0xd8] sm:$0xff]
    %v67 = vld [vmem:[#allocation3 + $0xe0] sm:$0xff]
    %v68 = vld [vmem:[#allocation3 + $0xe8] sm:$0xff]
    %v69 = vld [vmem:[#allocation3 + $0xf0] sm:$0xff]
    %v70 = vld [vmem:[#allocation3 + $0xf8] sm:$0xff]
    %v71 = vld [vmem:[#allocation3 + $0x100] sm:$0xff]
    %v72 = vld [vmem:[#allocation3 + $0x108] sm:$0xff]
    %v73 = vld [vmem:[#allocation3 + $0x110] sm:$0xff]
    %v74 = vld [vmem:[#allocation3 + $0x118] sm:$0xff]
    %v75 = vld [vmem:[#allocation3 + $0x120] sm:$0xff]
    %v76 = vld [vmem:[#allocation3 + $0x128] sm:$0xff]
    %v77 = vld [vmem:[#allocation3 + $0x130] sm:$0xff]
    %v78 = vld [vmem:[#allocation3 + $0x138] sm:$0xff]
    %v79 = vld [vmem:[#allocation3 + $0x140] sm:$0xff]
    %v80 = vld [vmem:[#allocation3 + $0x148] sm:$0xff]
    %v81 = vld [vmem:[#allocation3 + $0x150] sm:$0xff]
    %v82 = vld [vmem:[#allocation3 + $0x158] sm:$0xff]
    %v83 = vld [vmem:[#allocation3 + $0x160] sm:$0x1]
    %v84 = vld [vmem:[#allocation3 + $0x161] sm:$0x1]
    %v85 = vld [vmem:[#allocation3 + $0x162] sm:$0x1]
    %v86 = vld [vmem:[#allocation3 + $0x168] sm:$0xff]
    %v87 = vld [vmem:[#allocation3 + $0x170] sm:$0xff]
    %v88 = vld [vmem:[#allocation3 + $0x178] sm:$0xff]
    %v89 = vld [vmem:[#allocation3 + $0x180] sm:$0xff]
    %v90 = vld [vmem:[#allocation5] sm:$0xff]
    %v91 = vld [vmem:[#allocation5 + $0x8] sm:$0xff]
    %v92 = vld [vmem:[#allocation5 + $0x10] sm:$0xff]
    %v93 = vld [vmem:[#allocation5 + $0x18] sm:$0xff]
    %v94 = vld [vmem:[#allocation5 + $0x20] sm:$0xff]
    %v95 = vld [vmem:[#allocation5 + $0x28] sm:$0xff]
    %v96 = vld [vmem:[#allocation5 + $0x30] sm:$0xff]
    %v97 = vld [vmem:[#allocation5 + $0x38] sm:$0xff]
    %v98 = vld [vmem:[#allocation5 + $0x40] sm:$0xff]
    %v99 = vld [vmem:[#allocation5 + $0x48] sm:$0xff]
    %v100 = vlaneseq
    %v101 = vshrl.u32 %v100, 7
    %v102 = vsub.s32 0, %v101
    %v103 = vrot.slane %v83, %v102
    %104 = vmatprep.subr.mxu0 0.0
    %105 = vmatpush1.msra.mxu0 %v39
    %106 = vmatprep.subr.mxu0 0.0
    %107 = vmatpush1.msra.mxu0 %v40
    %108 = vmatprep.subr.mxu0 0.0
    %109 = vmatpush1.msra.mxu0 %v41
    %110 = vmatprep.subr.mxu0 0.0
    %111 = vmatpush1.msra.mxu0 %v42
    %112 = vmatprep.subr.mxu0 0.0
    %113 = vmatpush1.msra.mxu0 %v43
    %114 = vmatprep.subr.mxu0 0.0
    %115 = vmatpush1.msra.mxu0 %v44
    %116 = vmatprep.subr.mxu0 0.0
    %117 = vmatpush1.msra.mxu0 %v45
    %118 = vmatprep.subr.mxu0 0.0
    %119 = vmatpush1.msra.mxu0 %v46
    %120 = vmatprep.subr.mxu0 0.0
    %121 = vmatpush1.msra.mxu0 %v47
    %122 = vmatprep.subr.mxu0 0.0
    %123 = vmatpush1.msra.mxu0 %v48
    %124 = vmatprep.subr.mxu0 0.0
    %125 = vmatpush1.msra.mxu0 %v49
    %126 = vmatprep.subr.mxu0 0.0
    %127 = vmatpush1.msra.mxu0 %v50
    %128 = vmatprep.subr.mxu0 0.0
    %129 = vmatpush1.msra.mxu0 %v51
    %130 = vmatprep.subr.mxu0 0.0
    %131 = vmatpush1.msra.mxu0 %v52
    %132 = vmatprep.subr.mxu0 0.0
    %133 = vmatpush1.msra.mxu0 %v53
    %134 = vmatprep.subr.mxu0 0.0
    %135 = vmatpush1.msra.mxu0 %v54
    %136 = vmatprep.subr.mxu0 0.0
    %137 = vmatpush1.msra.mxu0 0.0
    %138 = vmatprep.subr.mxu0 0.0
    %139 = vmatpush1.msra.mxu0 0.0
    %140 = vmatprep.subr.mxu0 0.0
    %141 = vmatpush1.msra.mxu0 0.0
    %142 = vmatprep.subr.mxu0 0.0
    %143 = vmatpush1.msra.mxu0 0.0
    %144 = vmatprep.subr.mxu0 0.0
    %145 = vmatpush1.msra.mxu0 0.0
    %146 = vmatprep.subr.mxu0 0.0
    %147 = vmatpush1.msra.mxu0 0.0
    %148 = vmatprep.subr.mxu0 0.0
    %149 = vmatpush1.msra.mxu0 0.0
    %150 = vmatprep.subr.mxu0 0.0
    %151 = vmatpush1.msra.mxu0 0.0
    %152 = vmatprep.subr.mxu0 0.0
    %153 = vmatpush1.msra.mxu0 0.0
    %154 = vmatprep.subr.mxu0 0.0
    %155 = vmatpush1.msra.mxu0 0.0
    %156 = vmatprep.subr.mxu0 0.0
    %157 = vmatpush1.msra.mxu0 0.0
    %158 = vmatprep.subr.mxu0 0.0
    %159 = vmatpush1.msra.mxu0 0.0
    %160 = vmatprep.subr.mxu0 0.0
    %161 = vmatpush1.msra.mxu0 0.0
    %162 = vmatprep.subr.mxu0 0.0
    %163 = vmatpush1.msra.mxu0 0.0
    %164 = vmatprep.subr.mxu0 0.0
    %165 = vmatpush1.msra.mxu0 0.0
    %166 = vmatprep.subr.mxu0 0.0
    %167 = vmatpush1.msra.mxu0 0.0
    %168 = vmatprep.mubr.f32.mxu0 0.0
    %169 = vmatmul.mubr.f32.gmra.mrb[0].mxu0 %v91
    %v170 = vpop.f32.mrb[0].mxu0
    %v171 = vadd.f32 %v103, %v170
    %v172 = vpop.f32.mrb[0].mxu0
    %173 = vmatprep.mubr.f32.mxu0 0.0
    %174 = vmatmul.mubr.f32.gmra.mrb[0].mxu0 %v92
    %v175 = vpop.f32.mrb[0].mxu0
    %v176 = vadd.f32 %v103, %v175
    %v177 = vpop.f32.mrb[0].mxu0
    %178 = vmatprep.mubr.f32.mxu0 0.0
    %179 = vmatmul.mubr.f32.gmra.mrb[0].mxu0 %v93
    %v180 = vpop.f32.mrb[0].mxu0
    %v181 = vadd.f32 %v103, %v180
    %v182 = vpop.f32.mrb[0].mxu0
    %183 = vmatprep.mubr.f32.mxu0 0.0
    %184 = vmatmul.mubr.f32.gmra.mrb[0].mxu0 %v94
    %v185 = vpop.f32.mrb[0].mxu0
    %v186 = vadd.f32 %v103, %v185
    %v187 = vpop.f32.mrb[0].mxu0
    %188 = vmatprep.mubr.f32.mxu0 0.0
    %189 = vmatmul.mubr.f32.gmra.mrb[0].mxu0 %v95
    %v190 = vpop.f32.mrb[0].mxu0
    %v191 = vadd.f32 %v103, %v190
    %v192 = vpop.f32.mrb[0].mxu0
    %193 = vmatprep.mubr.f32.mxu0 0.0
    %194 = vmatmul.mubr.f32.gmra.mrb[0].mxu0 %v96
    %v195 = vpop.f32.mrb[0].mxu0
    %v196 = vadd.f32 %v103, %v195
    %v197 = vpop.f32.mrb[0].mxu0
    %198 = vmatprep.mubr.f32.mxu0 0.0
    %199 = vmatmul.mubr.f32.gmra.mrb[0].mxu0 %v97
    %v200 = vpop.f32.mrb[0].mxu0
    %v201 = vadd.f32 %v103, %v200
    %v202 = vpop.f32.mrb[0].mxu0
    %203 = vmatprep.mubr.f32.mxu0 0.0
    %204 = vmatmul.mubr.f32.gmra.mrb[0].mxu0 %v98
    %v205 = vpop.f32.mrb[0].mxu0
    %v206 = vadd.f32 %v103, %v205
    %v207 = vpop.f32.mrb[0].mxu0
    %208 = vdwg.mxu0
    %vm209 = vcmask 261120
    %v211 = vsel %vm209, 0.0, 0
    %213 = vmatprep.subr.mxu0 0.0
    %214 = vmatpush1.msra.mxu0 %v55
    %215 = vmatprep.subr.mxu0 0.0
    %216 = vmatpush1.msra.mxu0 %v56
    %217 = vmatprep.subr.mxu0 0.0
    %218 = vmatpush1.msra.mxu0 %v57
    %219 = vmatprep.subr.mxu0 0.0
    %220 = vmatpush1.msra.mxu0 %v58
    %221 = vmatprep.subr.mxu0 0.0
    %222 = vmatpush1.msra.mxu0 0.0
    %223 = vmatprep.subr.mxu0 0.0
    %224 = vmatpush1.msra.mxu0 0.0
    %225 = vmatprep.subr.mxu0 0.0
    %226 = vmatpush1.msra.mxu0 0.0
    %227 = vmatprep.subr.mxu0 0.0
    %228 = vmatpush1.msra.mxu0 0.0
    %229 = vmatprep.subr.mxu0 0.0
    %230 = vmatpush1.msra.mxu0 0.0
    %231 = vmatprep.subr.mxu0 0.0
    %232 = vmatpush1.msra.mxu0 0.0
    %233 = vmatprep.subr.mxu0 0.0
    %234 = vmatpush1.msra.mxu0 0.0
    %235 = vmatprep.subr.mxu0 0.0
    %236 = vmatpush1.msra.mxu0 0.0
    %237 = vmatprep.subr.mxu0 0.0
    %238 = vmatpush1.msra.mxu0 0.0
    %239 = vmatprep.subr.mxu0 0.0
    %240 = vmatpush1.msra.mxu0 0.0
    %241 = vmatprep.subr.mxu0 0.0
    %242 = vmatpush1.msra.mxu0 0.0
    %243 = vmatprep.subr.mxu0 0.0
    %244 = vmatpush1.msra.mxu0 0.0
    %245 = vmatprep.subr.mxu0 0.0
    %246 = vmatpush1.msra.mxu0 0.0
    %247 = vmatprep.subr.mxu0 0.0
    %248 = vmatpush1.msra.mxu0 0.0
    %249 = vmatprep.subr.mxu0 0.0
    %250 = vmatpush1.msra.mxu0 0.0
    %251 = vmatprep.subr.mxu0 0.0
    %252 = vmatpush1.msra.mxu0 0.0
    %253 = vmatprep.subr.mxu0 0.0
    %254 = vmatpush1.msra.mxu0 0.0
    %255 = vmatprep.subr.mxu0 0.0
    %256 = vmatpush1.msra.mxu0 0.0
    %257 = vmatprep.subr.mxu0 0.0
    %258 = vmatpush1.msra.mxu0 0.0
    %259 = vmatprep.subr.mxu0 0.0
    %260 = vmatpush1.msra.mxu0 0.0
    %261 = vmatprep.subr.mxu0 0.0
    %262 = vmatpush1.msra.mxu0 0.0
    %263 = vmatprep.subr.mxu0 0.0
    %264 = vmatpush1.msra.mxu0 0.0
    %265 = vmatprep.subr.mxu0 0.0
    %266 = vmatpush1.msra.mxu0 0.0
    %267 = vmatprep.subr.mxu0 0.0
    %268 = vmatpush1.msra.mxu0 0.0
    %269 = vmatprep.subr.mxu0 0.0
    %270 = vmatpush1.msra.mxu0 0.0
    %271 = vmatprep.subr.mxu0 0.0
    %272 = vmatpush1.msra.mxu0 0.0
    %273 = vmatprep.subr.mxu0 0.0
    %274 = vmatpush1.msra.mxu0 0.0
    %275 = vmatprep.subr.mxu0 0.0
    %276 = vmatpush1.msra.mxu0 0.0
    %277 = vmatprep.mubr.f32.mxu0 0.0
    %278 = vmatmul.mubr.f32.gmra.mrb[0].mxu0 %v211
    %v279 = vpop.f32.mrb[0].mxu0
    %v280 = vadd.f32 0.0, %v279
    %v281 = vpop.f32.mrb[0].mxu0
    %282 = vdwg.mxu0
    %v283 = vadd.f32 %v171, %v280
    %v284 = vmul.f32 %v283, 0.5
    %v285 = vtanh.pop %v284
    %v286 = vmul.f32 %v285, 0.5
    %v287 = vadd.f32 %v286, 0.5
    %v288 = vtanh.pop %v283
    %289 = vrot.lane.b32.xlu0 %v288, 64
    %v290 = vpop.permute.xlu0 %289
    %v291 = vmul.f32 %v287, 0.0
    %v292 = vmul.f32 %v287, %v290
    %294 = vrot.lane.b32.xlu0 %v292, 96
    %v295 = vpop.permute.xlu0 %294
    %v297 = vadd.f32 %v291, %v295
    %v298 = vtanh.pop %v297
    %300 = vrot.lane.b32.xlu0 %v298, 64
    %v301 = vpop.permute.xlu0 %300
    %v303 = vmul.f32 %v287, %v301
    %vm304 = vcmp.gt.f32.partialorder %v99, 0.0
    %306 = vrot.lane.b32.xlu0 %v303, 96
    %v307 = vpop.permute.xlu0 %306
    %v309 = vsel %vm304, %v307, 0.0
    %311 = vrot.lane.b32.xlu0 %v297, 32
    %v312 = vpop.permute.xlu0 %311
    %v314 = vsel %vm304, %v312, 0.0
    %v316 = vsel %vm209, %v309, 0
    %318 = vmatprep.subr.mxu0 0.0
    %319 = vmatpush1.msra.mxu0 %v55
    %320 = vmatprep.subr.mxu0 0.0
    %321 = vmatpush1.msra.mxu0 %v56
    %322 = vmatprep.subr.mxu0 0.0
    %323 = vmatpush1.msra.mxu0 %v57
    %324 = vmatprep.subr.mxu0 0.0
    %325 = vmatpush1.msra.mxu0 %v58
    %326 = vmatprep.subr.mxu0 0.0
    %327 = vmatpush1.msra.mxu0 0.0
    %328 = vmatprep.subr.mxu0 0.0
    %329 = vmatpush1.msra.mxu0 0.0
    %330 = vmatprep.subr.mxu0 0.0
    %331 = vmatpush1.msra.mxu0 0.0
    %332 = vmatprep.subr.mxu0 0.0
    %333 = vmatpush1.msra.mxu0 0.0
    %334 = vmatprep.subr.mxu0 0.0
    %335 = vmatpush1.msra.mxu0 0.0
    %336 = vmatprep.subr.mxu0 0.0
    %337 = vmatpush1.msra.mxu0 0.0
    %338 = vmatprep.subr.mxu0 0.0
    %339 = vmatpush1.msra.mxu0 0.0
    %340 = vmatprep.subr.mxu0 0.0
    %341 = vmatpush1.msra.mxu0 0.0
    %342 = vmatprep.subr.mxu0 0.0
    %343 = vmatpush1.msra.mxu0 0.0
    %344 = vmatprep.subr.mxu0 0.0
    %345 = vmatpush1.msra.mxu0 0.0
    %346 = vmatprep.subr.mxu0 0.0
    %347 = vmatpush1.msra.mxu0 0.0
    %348 = vmatprep.subr.mxu0 0.0
    %349 = vmatpush1.msra.mxu0 0.0
    %350 = vmatprep.subr.mxu0 0.0
    %351 = vmatpush1.msra.mxu0 0.0
    %352 = vmatprep.subr.mxu0 0.0
    %353 = vmatpush1.msra.mxu0 0.0
    %354 = vmatprep.subr.mxu0 0.0
    %355 = vmatpush1.msra.mxu0 0.0
    %356 = vmatprep.subr.mxu0 0.0
    %357 = vmatpush1.msra.mxu0 0.0
    %358 = vmatprep.subr.mxu0 0.0
    %359 = vmatpush1.msra.mxu0 0.0
    %360 = vmatprep.subr.mxu0 0.0
    %361 = vmatpush1.msra.mxu0 0.0
    %362 = vmatprep.subr.mxu0 0.0
    %363 = vmatpush1.msra.mxu0 0.0
    %364 = vmatprep.subr.mxu0 0.0
    %365 = vmatpush1.msra.mxu0 0.0
    %366 = vmatprep.subr.mxu0 0.0
    %367 = vmatpush1.msra.mxu0 0.0
    %368 = vmatprep.subr.mxu0 0.0
    %369 = vmatpush1.msra.mxu0 0.0
    %370 = vmatprep.subr.mxu0 0.0
    %371 = vmatpush1.msra.mxu0 0.0
    %372 = vmatprep.subr.mxu0 0.0
    %373 = vmatpush1.msra.mxu0 0.0
    %374 = vmatprep.subr.mxu0 0.0
    %375 = vmatpush1.msra.mxu0 0.0
    %376 = vmatprep.subr.mxu0 0.0
    %377 = vmatpush1.msra.mxu0 0.0
    %378 = vmatprep.subr.mxu0 0.0
    %379 = vmatpush1.msra.mxu0 0.0
    %380 = vmatprep.subr.mxu0 0.0
    %381 = vmatpush1.msra.mxu0 0.0
    %382 = vmatprep.mubr.f32.mxu0 0.0
    %383 = vmatmul.mubr.f32.gmra.mrb[0].mxu0 %v316
    %v384 = vpop.f32.mrb[0].mxu0
    %v385 = vadd.f32 0.0, %v384
    %v386 = vpop.f32.mrb[0].mxu0
    %387 = vdwg.mxu0
    %v388 = vadd.f32 %v176, %v385
    %v389 = vmul.f32 %v388, 0.5
    %v390 = vtanh.pop %v389
    %v391 = vmul.f32 %v390, 0.5
    %v392 = vadd.f32 %v391, 0.5
    %v393 = vtanh.pop %v388
    %394 = vrot.lane.b32.xlu0 %v393, 64
    %v395 = vpop.permute.xlu0 %394
    %397 = vrot.lane.b32.xlu0 %v314, 96
    %v398 = vpop.permute.xlu0 %397
    %v400 = vmul.f32 %v392, %v398
    %v401 = vmul.f32 %v392, %v395
    %403 = vrot.lane.b32.xlu0 %v401, 96
    %v404 = vpop.permute.xlu0 %403
    %v406 = vadd.f32 %v400, %v404
    %v407 = vtanh.pop %v406
    %409 = vrot.lane.b32.xlu0 %v407, 64
    %v410 = vpop.permute.xlu0 %409
    %v412 = vmul.f32 %v392, %v410
    %vm413 = vcmp.gt.f32.partialorder %v99, 1.0
    %415 = vrot.lane.b32.xlu0 %v412, 96
    %v416 = vpop.permute.xlu0 %415
    %v418 = vsel %vm413, %v416, %v309
    %420 = vrot.lane.b32.xlu0 %v406, 32
    %v421 = vpop.permute.xlu0 %420
    %v423 = vsel %vm413, %v421, %v314
    %v425 = vsel %vm209, %v418, 0
    %427 = vmatprep.subr.mxu0 0.0
    %428 = vmatpush1.msra.mxu0 %v55
    %429 = vmatprep.subr.mxu0 0.0
    %430 = vmatpush1.msra.mxu0 %v56
    %431 = vmatprep.subr.mxu0 0.0
    %432 = vmatpush1.msra.mxu0 %v57
    %433 = vmatprep.subr.mxu0 0.0
    %434 = vmatpush1.msra.mxu0 %v58
    %435 = vmatprep.subr.mxu0 0.0
    %436 = vmatpush1.msra.mxu0 0.0
    %437 = vmatprep.subr.mxu0 0.0
    %438 = vmatpush1.msra.mxu0 0.0
    %439 = vmatprep.subr.mxu0 0.0
    %440 = vmatpush1.msra.mxu0 0.0
    %441 = vmatprep.subr.mxu0 0.0
    %442 = vmatpush1.msra.mxu0 0.0
    %443 = vmatprep.subr.mxu0 0.0
    %444 = vmatpush1.msra.mxu0 0.0
    %445 = vmatprep.subr.mxu0 0.0
    %446 = vmatpush1.msra.mxu0 0.0
    %447 = vmatprep.subr.mxu0 0.0
    %448 = vmatpush1.msra.mxu0 0.0
    %449 = vmatprep.subr.mxu0 0.0
    %450 = vmatpush1.msra.mxu0 0.0
    %451 = vmatprep.subr.mxu0 0.0
    %452 = vmatpush1.msra.mxu0 0.0
    %453 = vmatprep.subr.mxu0 0.0
    %454 = vmatpush1.msra.mxu0 0.0
    %455 = vmatprep.subr.mxu0 0.0
    %456 = vmatpush1.msra.mxu0 0.0
    %457 = vmatprep.subr.mxu0 0.0
    %458 = vmatpush1.msra.mxu0 0.0
    %459 = vmatprep.subr.mxu0 0.0
    %460 = vmatpush1.msra.mxu0 0.0
    %461 = vmatprep.subr.mxu0 0.0
    %462 = vmatpush1.msra.mxu0 0.0
    %463 = vmatprep.subr.mxu0 0.0
    %464 = vmatpush1.msra.mxu0 0.0
    %465 = vmatprep.subr.mxu0 0.0
    %466 = vmatpush1.msra.mxu0 0.0
    %467 = vmatprep.subr.mxu0 0.0
    %468 = vmatpush1.msra.mxu0 0.0
    %469 = vmatprep.subr.mxu0 0.0
    %470 = vmatpush1.msra.mxu0 0.0
    %471 = vmatprep.subr.mxu0 0.0
    %472 = vmatpush1.msra.mxu0 0.0
    %473 = vmatprep.subr.mxu0 0.0
    %474 = vmatpush1.msra.mxu0 0.0
    %475 = vmatprep.subr.mxu0 0.0
    %476 = vmatpush1.msra.mxu0 0.0
    %477 = vmatprep.subr.mxu0 0.0
    %478 = vmatpush1.msra.mxu0 0.0
    %479 = vmatprep.subr.mxu0 0.0
    %480 = vmatpush1.msra.mxu0 0.0
    %481 = vmatprep.subr.mxu0 0.0
    %482 = vmatpush1.msra.mxu0 0.0
    %483 = vmatprep.subr.mxu0 0.0
    %484 = vmatpush1.msra.mxu0 0.0
    %485 = vmatprep.subr.mxu0 0.0
    %486 = vmatpush1.msra.mxu0 0.0
    %487 = vmatprep.subr.mxu0 0.0
    %488 = vmatpush1.msra.mxu0 0.0
    %489 = vmatprep.subr.mxu0 0.0
    %490 = vmatpush1.msra.mxu0 0.0
    %491 = vmatprep.mubr.f32.mxu0 0.0
    %492 = vmatmul.mubr.f32.gmra.mrb[0].mxu0 %v425
    %v493 = vpop.f32.mrb[0].mxu0
    %v494 = vadd.f32 0.0, %v493
    %v495 = vpop.f32.mrb[0].mxu0
    %496 = vdwg.mxu0
    %v497 = vadd.f32 %v181, %v494
    %v498 = vmul.f32 %v497, 0.5
    %v499 = vtanh.pop %v498
    %v500 = vmul.f32 %v499, 0.5
    %v501 = vadd.f32 %v500, 0.5
    %v502 = vtanh.pop %v497
    %503 = vrot.lane.b32.xlu0 %v502, 64
    %v504 = vpop.permute.xlu0 %503
    %506 = vrot.lane.b32.xlu0 %v423, 96
    %v507 = vpop.permute.xlu0 %506
    %v509 = vmul.f32 %v501, %v507
    %v510 = vmul.f32 %v501, %v504
    %512 = vrot.lane.b32.xlu0 %v510, 96
    %v513 = vpop.permute.xlu0 %512
    %v515 = vadd.f32 %v509, %v513
    %v516 = vtanh.pop %v515
    %518 = vrot.lane.b32.xlu0 %v516, 64
    %v519 = vpop.permute.xlu0 %518
    %v521 = vmul.f32 %v501, %v519
    %vm522 = vcmp.gt.f32.partialorder %v99, 2.0
    %524 = vrot.lane.b32.xlu0 %v521, 96
    %v525 = vpop.permute.xlu0 %524
    %v527 = vsel %vm522, %v525, %v418
    %529 = vrot.lane.b32.xlu0 %v515, 32
    %v530 = vpop.permute.xlu0 %529
    %v532 = vsel %vm522, %v530, %v423
    %v534 = vsel %vm209, %v527, 0
    %536 = vmatprep.subr.mxu0 0.0
    %537 = vmatpush1.msra.mxu0 %v55
    %538 = vmatprep.subr.mxu0 0.0
    %539 = vmatpush1.msra.mxu0 %v56
    %540 = vmatprep.subr.mxu0 0.0
    %541 = vmatpush1.msra.mxu0 %v57
    %542 = vmatprep.subr.mxu0 0.0
    %543 = vmatpush1.msra.mxu0 %v58
    %544 = vmatprep.subr.mxu0 0.0
    %545 = vmatpush1.msra.mxu0 0.0
    %546 = vmatprep.subr.mxu0 0.0
    %547 = vmatpush1.msra.mxu0 0.0
    %548 = vmatprep.subr.mxu0 0.0
    %549 = vmatpush1.msra.mxu0 0.0
    %550 = vmatprep.subr.mxu0 0.0
    %551 = vmatpush1.msra.mxu0 0.0
    %552 = vmatprep.subr.mxu0 0.0
    %553 = vmatpush1.msra.mxu0 0.0
    %554 = vmatprep.subr.mxu0 0.0
    %555 = vmatpush1.msra.mxu0 0.0
    %556 = vmatprep.subr.mxu0 0.0
    %557 = vmatpush1.msra.mxu0 0.0
    %558 = vmatprep.subr.mxu0 0.0
    %559 = vmatpush1.msra.mxu0 0.0
    %560 = vmatprep.subr.mxu0 0.0
    %561 = vmatpush1.msra.mxu0 0.0
    %562 = vmatprep.subr.mxu0 0.0
    %563 = vmatpush1.msra.mxu0 0.0
    %564 = vmatprep.subr.mxu0 0.0
    %565 = vmatpush1.msra.mxu0 0.0
    %566 = vmatprep.subr.mxu0 0.0
    %567 = vmatpush1.msra.mxu0 0.0
    %568 = vmatprep.subr.mxu0 0.0
    %569 = vmatpush1.msra.mxu0 0.0
    %570 = vmatprep.subr.mxu0 0.0
    %571 = vmatpush1.msra.mxu0 0.0
    %572 = vmatprep.subr.mxu0 0.0
    %573 = vmatpush1.msra.mxu0 0.0
    %574 = vmatprep.subr.mxu0 0.0
    %575 = vmatpush1.msra.mxu0 0.0
    %576 = vmatprep.subr.mxu0 0.0
    %577 = vmatpush1.msra.mxu0 0.0
    %578 = vmatprep.subr.mxu0 0.0
    %579 = vmatpush1.msra.mxu0 0.0
    %580 = vmatprep.subr.mxu0 0.0
    %581 = vmatpush1.msra.mxu0 0.0
    %582 = vmatprep.subr.mxu0 0.0
    %583 = vmatpush1.msra.mxu0 0.0
    %584 = vmatprep.subr.mxu0 0.0
    %585 = vmatpush1.msra.mxu0 0.0
    %586 = vmatprep.subr.mxu0 0.0
    %587 = vmatpush1.msra.mxu0 0.0
    %588 = vmatprep.subr.mxu0 0.0
    %589 = vmatpush1.msra.mxu0 0.0
    %590 = vmatprep.subr.mxu0 0.0
    %591 = vmatpush1.msra.mxu0 0.0
    %592 = vmatprep.subr.mxu0 0.0
    %593 = vmatpush1.msra.mxu0 0.0
    %594 = vmatprep.subr.mxu0 0.0
    %595 = vmatpush1.msra.mxu0 0.0
    %596 = vmatprep.subr.mxu0 0.0
    %597 = vmatpush1.msra.mxu0 0.0
    %598 = vmatprep.subr.mxu0 0.0
    %599 = vmatpush1.msra.mxu0 0.0
    %600 = vmatprep.mubr.f32.mxu0 0.0
    %601 = vmatmul.mubr.f32.gmra.mrb[0].mxu0 %v534
    %v602 = vpop.f32.mrb[0].mxu0
    %v603 = vadd.f32 0.0, %v602
    %v604 = vpop.f32.mrb[0].mxu0
    %605 = vdwg.mxu0
    %v606 = vadd.f32 %v186, %v603
    %v607 = vmul.f32 %v606, 0.5
    %v608 = vtanh.pop %v607
    %v609 = vmul.f32 %v608, 0.5
    %v610 = vadd.f32 %v609, 0.5
    %v611 = vtanh.pop %v606
    %612 = vrot.lane.b32.xlu0 %v611, 64
    %v613 = vpop.permute.xlu0 %612
    %615 = vrot.lane.b32.xlu0 %v532, 96
    %v616 = vpop.permute.xlu0 %615
    %v618 = vmul.f32 %v610, %v616
    %v619 = vmul.f32 %v610, %v613
    %621 = vrot.lane.b32.xlu0 %v619, 96
    %v622 = vpop.permute.xlu0 %621
    %v624 = vadd.f32 %v618, %v622
    %v625 = vtanh.pop %v624
    %627 = vrot.lane.b32.xlu0 %v625, 64
    %v628 = vpop.permute.xlu0 %627
    %v630 = vmul.f32 %v610, %v628
    %vm631 = vcmp.gt.f32.partialorder %v99, 3.0
    %633 = vrot.lane.b32.xlu0 %v630, 96
    %v634 = vpop.permute.xlu0 %633
    %v636 = vsel %vm631, %v634, %v527
    %638 = vrot.lane.b32.xlu0 %v624, 32
    %v639 = vpop.permute.xlu0 %638
    %v641 = vsel %vm631, %v639, %v532
    %v643 = vsel %vm209, %v636, 0
    %645 = vmatprep.subr.mxu0 0.0
    %646 = vmatpush1.msra.mxu0 %v55
    %647 = vmatprep.subr.mxu0 0.0
    %648 = vmatpush1.msra.mxu0 %v56
    %649 = vmatprep.subr.mxu0 0.0
    %650 = vmatpush1.msra.mxu0 %v57
    %651 = vmatprep.subr.mxu0 0.0
    %652 = vmatpush1.msra.mxu0 %v58
    %653 = vmatprep.subr.mxu0 0.0
    %654 = vmatpush1.msra.mxu0 0.0
    %655 = vmatprep.subr.mxu0 0.0
    %656 = vmatpush1.msra.mxu0 0.0
    %657 = vmatprep.subr.mxu0 0.0
    %658 = vmatpush1.msra.mxu0 0.0
    %659 = vmatprep.subr.mxu0 0.0
    %660 = vmatpush1.msra.mxu0 0.0
    %661 = vmatprep.subr.mxu0 0.0
    %662 = vmatpush1.msra.mxu0 0.0
    %663 = vmatprep.subr.mxu0 0.0
    %664 = vmatpush1.msra.mxu0 0.0
    %665 = vmatprep.subr.mxu0 0.0
    %666 = vmatpush1.msra.mxu0 0.0
    %667 = vmatprep.subr.mxu0 0.0
    %668 = vmatpush1.msra.mxu0 0.0
    %669 = vmatprep.subr.mxu0 0.0
    %670 = vmatpush1.msra.mxu0 0.0
    %671 = vmatprep.subr.mxu0 0.0
    %672 = vmatpush1.msra.mxu0 0.0
    %673 = vmatprep.subr.mxu0 0.0
    %674 = vmatpush1.msra.mxu0 0.0
    %675 = vmatprep.subr.mxu0 0.0
    %676 = vmatpush1.msra.mxu0 0.0
    %677 = vmatprep.subr.mxu0 0.0
    %678 = vmatpush1.msra.mxu0 0.0
    %679 = vmatprep.subr.mxu0 0.0
    %680 = vmatpush1.msra.mxu0 0.0
    %681 = vmatprep.subr.mxu0 0.0
    %682 = vmatpush1.msra.mxu0 0.0
    %683 = vmatprep.subr.mxu0 0.0
    %684 = vmatpush1.msra.mxu0 0.0
    %685 = vmatprep.subr.mxu0 0.0
    %686 = vmatpush1.msra.mxu0 0.0
    %687 = vmatprep.subr.mxu0 0.0
    %688 = vmatpush1.msra.mxu0 0.0
    %689 = vmatprep.subr.mxu0 0.0
    %690 = vmatpush1.msra.mxu0 0.0
    %691 = vmatprep.subr.mxu0 0.0
    %692 = vmatpush1.msra.mxu0 0.0
    %693 = vmatprep.subr.mxu0 0.0
    %694 = vmatpush1.msra.mxu0 0.0
    %695 = vmatprep.subr.mxu0 0.0
    %696 = vmatpush1.msra.mxu0 0.0
    %697 = vmatprep.subr.mxu0 0.0
    %698 = vmatpush1.msra.mxu0 0.0
    %699 = vmatprep.subr.mxu0 0.0
    %700 = vmatpush1.msra.mxu0 0.0
    %701 = vmatprep.subr.mxu0 0.0
    %702 = vmatpush1.msra.mxu0 0.0
    %703 = vmatprep.subr.mxu0 0.0
    %704 = vmatpush1.msra.mxu0 0.0
    %705 = vmatprep.subr.mxu0 0.0
    %706 = vmatpush1.msra.mxu0 0.0
    %707 = vmatprep.subr.mxu0 0.0
    %708 = vmatpush1.msra.mxu0 0.0
    %709 = vmatprep.mubr.f32.mxu0 0.0
    %710 = vmatmul.mubr.f32.gmra.mrb[0].mxu0 %v643
    %v711 = vpop.f32.mrb[0].mxu0
    %v712 = vadd.f32 0.0, %v711
    %v713 = vpop.f32.mrb[0].mxu0
    %714 = vdwg.mxu0
    %v715 = vadd.f32 %v191, %v712
    %v716 = vmul.f32 %v715, 0.5
    %v717 = vtanh.pop %v716
    %v718 = vmul.f32 %v717, 0.5
    %v719 = vadd.f32 %v718, 0.5
    %v720 = vtanh.pop %v715
    %721 = vrot.lane.b32.xlu0 %v720, 64
    %v722 = vpop.permute.xlu0 %721
    %724 = vrot.lane.b32.xlu0 %v641, 96
    %v725 = vpop.permute.xlu0 %724
    %v727 = vmul.f32 %v719, %v725
    %v728 = vmul.f32 %v719, %v722
    %730 = vrot.lane.b32.xlu0 %v728, 96
    %v731 = vpop.permute.xlu0 %730
    %v733 = vadd.f32 %v727, %v731
    %v734 = vtanh.pop %v733
    %736 = vrot.lane.b32.xlu0 %v734, 64
    %v737 = vpop.permute.xlu0 %736
    %v739 = vmul.f32 %v719, %v737
    %vm740 = vcmp.gt.f32.partialorder %v99, 4.0
    %742 = vrot.lane.b32.xlu0 %v739, 96
    %v743 = vpop.permute.xlu0 %742
    %v745 = vsel %vm740, %v743, %v636
    %747 = vrot.lane.b32.xlu0 %v733, 32
    %v748 = vpop.permute.xlu0 %747
    %v750 = vsel %vm740, %v748, %v641
    %v752 = vsel %vm209, %v745, 0
    %754 = vmatprep.subr.mxu0 0.0
    %755 = vmatpush1.msra.mxu0 %v55
    %756 = vmatprep.subr.mxu0 0.0
    %757 = vmatpush1.msra.mxu0 %v56
    %758 = vmatprep.subr.mxu0 0.0
    %759 = vmatpush1.msra.mxu0 %v57
    %760 = vmatprep.subr.mxu0 0.0
    %761 = vmatpush1.msra.mxu0 %v58
    %762 = vmatprep.subr.mxu0 0.0
    %763 = vmatpush1.msra.mxu0 0.0
    %764 = vmatprep.subr.mxu0 0.0
    %765 = vmatpush1.msra.mxu0 0.0
    %766 = vmatprep.subr.mxu0 0.0
    %767 = vmatpush1.msra.mxu0 0.0
    %768 = vmatprep.subr.mxu0 0.0
    %769 = vmatpush1.msra.mxu0 0.0
    %770 = vmatprep.subr.mxu0 0.0
    %771 = vmatpush1.msra.mxu0 0.0
    %772 = vmatprep.subr.mxu0 0.0
    %773 = vmatpush1.msra.mxu0 0.0
    %774 = vmatprep.subr.mxu0 0.0
    %775 = vmatpush1.msra.mxu0 0.0
    %776 = vmatprep.subr.mxu0 0.0
    %777 = vmatpush1.msra.mxu0 0.0
    %778 = vmatprep.subr.mxu0 0.0
    %779 = vmatpush1.msra.mxu0 0.0
    %780 = vmatprep.subr.mxu0 0.0
    %781 = vmatpush1.msra.mxu0 0.0
    %782 = vmatprep.subr.mxu0 0.0
    %783 = vmatpush1.msra.mxu0 0.0
    %784 = vmatprep.subr.mxu0 0.0
    %785 = vmatpush1.msra.mxu0 0.0
    %786 = vmatprep.subr.mxu0 0.0
    %787 = vmatpush1.msra.mxu0 0.0
    %788 = vmatprep.subr.mxu0 0.0
    %789 = vmatpush1.msra.mxu0 0.0
    %790 = vmatprep.subr.mxu0 0.0
    %791 = vmatpush1.msra.mxu0 0.0
    %792 = vmatprep.subr.mxu0 0.0
    %793 = vmatpush1.msra.mxu0 0.0
    %794 = vmatprep.subr.mxu0 0.0
    %795 = vmatpush1.msra.mxu0 0.0
    %796 = vmatprep.subr.mxu0 0.0
    %797 = vmatpush1.msra.mxu0 0.0
    %798 = vmatprep.subr.mxu0 0.0
    %799 = vmatpush1.msra.mxu0 0.0
    %800 = vmatprep.subr.mxu0 0.0
    %801 = vmatpush1.msra.mxu0 0.0
    %802 = vmatprep.subr.mxu0 0.0
    %803 = vmatpush1.msra.mxu0 0.0
    %804 = vmatprep.subr.mxu0 0.0
    %805 = vmatpush1.msra.mxu0 0.0
    %806 = vmatprep.subr.mxu0 0.0
    %807 = vmatpush1.msra.mxu0 0.0
    %808 = vmatprep.subr.mxu0 0.0
    %809 = vmatpush1.msra.mxu0 0.0
    %810 = vmatprep.subr.mxu0 0.0
    %811 = vmatpush1.msra.mxu0 0.0
    %812 = vmatprep.subr.mxu0 0.0
    %813 = vmatpush1.msra.mxu0 0.0
    %814 = vmatprep.subr.mxu0 0.0
    %815 = vmatpush1.msra.mxu0 0.0
    %816 = vmatprep.subr.mxu0 0.0
    %817 = vmatpush1.msra.mxu0 0.0
    %818 = vmatprep.mubr.f32.mxu0 0.0
    %819 = vmatmul.mubr.f32.gmra.mrb[0].mxu0 %v752
    %v820 = vpop.f32.mrb[0].mxu0
    %v821 = vadd.f32 0.0, %v820
    %v822 = vpop.f32.mrb[0].mxu0
    %823 = vdwg.mxu0
    %v824 = vadd.f32 %v196, %v821
    %v825 = vmul.f32 %v824, 0.5
    %v826 = vtanh.pop %v825
    %v827 = vmul.f32 %v826, 0.5
    %v828 = vadd.f32 %v827, 0.5
    %v829 = vtanh.pop %v824
    %830 = vrot.lane.b32.xlu0 %v829, 64
    %v831 = vpop.permute.xlu0 %830
    %833 = vrot.lane.b32.xlu0 %v750, 96
    %v834 = vpop.permute.xlu0 %833
    %v836 = vmul.f32 %v828, %v834
    %v837 = vmul.f32 %v828, %v831
    %839 = vrot.lane.b32.xlu0 %v837, 96
    %v840 = vpop.permute.xlu0 %839
    %v842 = vadd.f32 %v836, %v840
    %v843 = vtanh.pop %v842
    %845 = vrot.lane.b32.xlu0 %v843, 64
    %v846 = vpop.permute.xlu0 %845
    %v848 = vmul.f32 %v828, %v846
    %vm849 = vcmp.gt.f32.partialorder %v99, 5.0
    %851 = vrot.lane.b32.xlu0 %v848, 96
    %v852 = vpop.permute.xlu0 %851
    %v854 = vsel %vm849, %v852, %v745
    %856 = vrot.lane.b32.xlu0 %v842, 32
    %v857 = vpop.permute.xlu0 %856
    %v859 = vsel %vm849, %v857, %v750
    %v861 = vsel %vm209, %v854, 0
    %863 = vmatprep.subr.mxu0 0.0
    %864 = vmatpush1.msra.mxu0 %v55
    %865 = vmatprep.subr.mxu0 0.0
    %866 = vmatpush1.msra.mxu0 %v56
    %867 = vmatprep.subr.mxu0 0.0
    %868 = vmatpush1.msra.mxu0 %v57
    %869 = vmatprep.subr.mxu0 0.0
    %870 = vmatpush1.msra.mxu0 %v58
    %871 = vmatprep.subr.mxu0 0.0
    %872 = vmatpush1.msra.mxu0 0.0
    %873 = vmatprep.subr.mxu0 0.0
    %874 = vmatpush1.msra.mxu0 0.0
    %875 = vmatprep.subr.mxu0 0.0
    %876 = vmatpush1.msra.mxu0 0.0
    %877 = vmatprep.subr.mxu0 0.0
    %878 = vmatpush1.msra.mxu0 0.0
    %879 = vmatprep.subr.mxu0 0.0
    %880 = vmatpush1.msra.mxu0 0.0
    %881 = vmatprep.subr.mxu0 0.0
    %882 = vmatpush1.msra.mxu0 0.0
    %883 = vmatprep.subr.mxu0 0.0
    %884 = vmatpush1.msra.mxu0 0.0
    %885 = vmatprep.subr.mxu0 0.0
    %886 = vmatpush1.msra.mxu0 0.0
    %887 = vmatprep.subr.mxu0 0.0
    %888 = vmatpush1.msra.mxu0 0.0
    %889 = vmatprep.subr.mxu0 0.0
    %890 = vmatpush1.msra.mxu0 0.0
    %891 = vmatprep.subr.mxu0 0.0
    %892 = vmatpush1.msra.mxu0 0.0
    %893 = vmatprep.subr.mxu0 0.0
    %894 = vmatpush1.msra.mxu0 0.0
    %895 = vmatprep.subr.mxu0 0.0
    %896 = vmatpush1.msra.mxu0 0.0
    %897 = vmatprep.subr.mxu0 0.0
    %898 = vmatpush1.msra.mxu0 0.0
    %899 = vmatprep.subr.mxu0 0.0
    %900 = vmatpush1.msra.mxu0 0.0
    %901 = vmatprep.subr.mxu0 0.0
    %902 = vmatpush1.msra.mxu0 0.0
    %903 = vmatprep.subr.mxu0 0.0
    %904 = vmatpush1.msra.mxu0 0.0
    %905 = vmatprep.subr.mxu0 0.0
    %906 = vmatpush1.msra.mxu0 0.0
    %907 = vmatprep.subr.mxu0 0.0
    %908 = vmatpush1.msra.mxu0 0.0
    %909 = vmatprep.subr.mxu0 0.0
    %910 = vmatpush1.msra.mxu0 0.0
    %911 = vmatprep.subr.mxu0 0.0
    %912 = vmatpush1.msra.mxu0 0.0
    %913 = vmatprep.subr.mxu0 0.0
    %914 = vmatpush1.msra.mxu0 0.0
    %915 = vmatprep.subr.mxu0 0.0
    %916 = vmatpush1.msra.mxu0 0.0
    %917 = vmatprep.subr.mxu0 0.0
    %918 = vmatpush1.msra.mxu0 0.0
    %919 = vmatprep.subr.mxu0 0.0
    %920 = vmatpush1.msra.mxu0 0.0
    %921 = vmatprep.subr.mxu0 0.0
    %922 = vmatpush1.msra.mxu0 0.0
    %923 = vmatprep.subr.mxu0 0.0
    %924 = vmatpush1.msra.mxu0 0.0
    %925 = vmatprep.subr.mxu0 0.0
    %926 = vmatpush1.msra.mxu0 0.0
    %927 = vmatprep.mubr.f32.mxu0 0.0
    %928 = vmatmul.mubr.f32.gmra.mrb[0].mxu0 %v861
    %v929 = vpop.f32.mrb[0].mxu0
    %v930 = vadd.f32 0.0, %v929
    %v931 = vpop.f32.mrb[0].mxu0
    %932 = vdwg.mxu0
    %v933 = vadd.f32 %v201, %v930
    %v934 = vmul.f32 %v933, 0.5
    %v935 = vtanh.pop %v934
    %v936 = vmul.f32 %v935, 0.5
    %v937 = vadd.f32 %v936, 0.5
    %v938 = vtanh.pop %v933
    %939 = vrot.lane.b32.xlu0 %v938, 64
    %v940 = vpop.permute.xlu0 %939
    %942 = vrot.lane.b32.xlu0 %v859, 96
    %v943 = vpop.permute.xlu0 %942
    %v945 = vmul.f32 %v937, %v943
    %v946 = vmul.f32 %v937, %v940
    %948 = vrot.lane.b32.xlu0 %v946, 96
    %v949 = vpop.permute.xlu0 %948
    %v951 = vadd.f32 %v945, %v949
    %v952 = vtanh.pop %v951
    %954 = vrot.lane.b32.xlu0 %v952, 64
    %v955 = vpop.permute.xlu0 %954
    %v957 = vmul.f32 %v937, %v955
    %vm958 = vcmp.gt.f32.partialorder %v99, 6.0
    %960 = vrot.lane.b32.xlu0 %v957, 96
    %v961 = vpop.permute.xlu0 %960
    %v963 = vsel %vm958, %v961, %v854
    %965 = vrot.lane.b32.xlu0 %v951, 32
    %v966 = vpop.permute.xlu0 %965
    %v968 = vsel %vm958, %v966, %v859
    %v970 = vsel %vm209, %v963, 0
    %972 = vmatprep.subr.mxu0 0.0
    %973 = vmatpush1.msra.mxu0 %v55
    %974 = vmatprep.subr.mxu0 0.0
    %975 = vmatpush1.msra.mxu0 %v56
    %976 = vmatprep.subr.mxu0 0.0
    %977 = vmatpush1.msra.mxu0 %v57
    %978 = vmatprep.subr.mxu0 0.0
    %979 = vmatpush1.msra.mxu0 %v58
    %980 = vmatprep.subr.mxu0 0.0
    %981 = vmatpush1.msra.mxu0 0.0
    %982 = vmatprep.subr.mxu0 0.0
    %983 = vmatpush1.msra.mxu0 0.0
    %984 = vmatprep.subr.mxu0 0.0
    %985 = vmatpush1.msra.mxu0 0.0
    %986 = vmatprep.subr.mxu0 0.0
    %987 = vmatpush1.msra.mxu0 0.0
    %988 = vmatprep.subr.mxu0 0.0
    %989 = vmatpush1.msra.mxu0 0.0
    %990 = vmatprep.subr.mxu0 0.0
    %991 = vmatpush1.msra.mxu0 0.0
    %992 = vmatprep.subr.mxu0 0.0
    %993 = vmatpush1.msra.mxu0 0.0
    %994 = vmatprep.subr.mxu0 0.0
    %995 = vmatpush1.msra.mxu0 0.0
    %996 = vmatprep.subr.mxu0 0.0
    %997 = vmatpush1.msra.mxu0 0.0
    %998 = vmatprep.subr.mxu0 0.0
    %999 = vmatpush1.msra.mxu0 0.0
    %1000 = vmatprep.subr.mxu0 0.0
    %1001 = vmatpush1.msra.mxu0 0.0
    %1002 = vmatprep.subr.mxu0 0.0
    %1003 = vmatpush1.msra.mxu0 0.0
    %1004 = vmatprep.subr.mxu0 0.0
    %1005 = vmatpush1.msra.mxu0 0.0
    %1006 = vmatprep.subr.mxu0 0.0
    %1007 = vmatpush1.msra.mxu0 0.0
    %1008 = vmatprep.subr.mxu0 0.0
    %1009 = vmatpush1.msra.mxu0 0.0
    %1010 = vmatprep.subr.mxu0 0.0
    %1011 = vmatpush1.msra.mxu0 0.0
    %1012 = vmatprep.subr.mxu0 0.0
    %1013 = vmatpush1.msra.mxu0 0.0
    %1014 = vmatprep.subr.mxu0 0.0
    %1015 = vmatpush1.msra.mxu0 0.0
    %1016 = vmatprep.subr.mxu0 0.0
    %1017 = vmatpush1.msra.mxu0 0.0
    %1018 = vmatprep.subr.mxu0 0.0
    %1019 = vmatpush1.msra.mxu0 0.0
    %1020 = vmatprep.subr.mxu0 0.0
    %1021 = vmatpush1.msra.mxu0 0.0
    %1022 = vmatprep.subr.mxu0 0.0
    %1023 = vmatpush1.msra.mxu0 0.0
    %1024 = vmatprep.subr.mxu0 0.0
    %1025 = vmatpush1.msra.mxu0 0.0
    %1026 = vmatprep.subr.mxu0 0.0
    %1027 = vmatpush1.msra.mxu0 0.0
    %1028 = vmatprep.subr.mxu0 0.0
    %1029 = vmatpush1.msra.mxu0 0.0
    %1030 = vmatprep.subr.mxu0 0.0
    %1031 = vmatpush1.msra.mxu0 0.0
    %1032 = vmatprep.subr.mxu0 0.0
    %1033 = vmatpush1.msra.mxu0 0.0
    %1034 = vmatprep.subr.mxu0 0.0
    %1035 = vmatpush1.msra.mxu0 0.0
    %1036 = vmatprep.mubr.f32.mxu0 0.0
    %1037 = vmatmul.mubr.f32.gmra.mrb[0].mxu0 %v970
    %v1038 = vpop.f32.mrb[0].mxu0
    %v1039 = vadd.f32 0.0, %v1038
    %v1040 = vpop.f32.mrb[0].mxu0
    %1041 = vdwg.mxu0
    %v1042 = vadd.f32 %v206, %v1039
    %v1043 = vmul.f32 %v1042, 0.5
    %v1044 = vtanh.pop %v1043
    %v1045 = vmul.f32 %v1044, 0.5
    %v1046 = vadd.f32 %v1045, 0.5
    %v1047 = vtanh.pop %v1042
    %1048 = vrot.lane.b32.xlu0 %v1047, 64
    %v1049 = vpop.permute.xlu0 %1048
    %1051 = vrot.lane.b32.xlu0 %v968, 96
    %v1052 = vpop.permute.xlu0 %1051
    %v1054 = vmul.f32 %v1046, %v1052
    %v1055 = vmul.f32 %v1046, %v1049
    %1057 = vrot.lane.b32.xlu0 %v1055, 96
    %v1058 = vpop.permute.xlu0 %1057
    %v1060 = vadd.f32 %v1054, %v1058
    %v1061 = vtanh.pop %v1060
    %1063 = vrot.lane.b32.xlu0 %v1061, 64
    %v1064 = vpop.permute.xlu0 %1063
    %v1066 = vmul.f32 %v1046, %v1064
    %vm1067 = vcmp.gt.f32.partialorder %v99, 7.0
    %1069 = vrot.lane.b32.xlu0 %v1066, 96
    %v1070 = vpop.permute.xlu0 %1069
    %v1072 = vsel %vm1067, %v1070, %v963
    %v1074 = vsel %vm209, %v1072, 0
    %1076 = vmatprep.subr.mxu0 0.0
    %1077 = vmatpush1.msra.mxu0 %v75
    %1078 = vmatprep.subr.mxu0 0.0
    %1079 = vmatpush1.msra.mxu0 %v76
    %1080 = vmatprep.subr.mxu0 0.0
    %1081 = vmatpush1.msra.mxu0 %v77
    %1082 = vmatprep.subr.mxu0 0.0
    %1083 = vmatpush1.msra.mxu0 %v78
    %1084 = vmatprep.subr.mxu0 0.0
    %1085 = vmatpush1.msra.mxu0 0.0
    %1086 = vmatprep.subr.mxu0 0.0
    %1087 = vmatpush1.msra.mxu0 0.0
    %1088 = vmatprep.subr.mxu0 0.0
    %1089 = vmatpush1.msra.mxu0 0.0
    %1090 = vmatprep.subr.mxu0 0.0
    %1091 = vmatpush1.msra.mxu0 0.0
    %1092 = vmatprep.subr.mxu0 0.0
    %1093 = vmatpush1.msra.mxu0 0.0
    %1094 = vmatprep.subr.mxu0 0.0
    %1095 = vmatpush1.msra.mxu0 0.0
    %1096 = vmatprep.subr.mxu0 0.0
    %1097 = vmatpush1.msra.mxu0 0.0
    %1098 = vmatprep.subr.mxu0 0.0
    %1099 = vmatpush1.msra.mxu0 0.0
    %1100 = vmatprep.subr.mxu0 0.0
    %1101 = vmatpush1.msra.mxu0 0.0
    %1102 = vmatprep.subr.mxu0 0.0
    %1103 = vmatpush1.msra.mxu0 0.0
    %1104 = vmatprep.subr.mxu0 0.0
    %1105 = vmatpush1.msra.mxu0 0.0
    %1106 = vmatprep.subr.mxu0 0.0
    %1107 = vmatpush1.msra.mxu0 0.0
    %1108 = vmatprep.subr.mxu0 0.0
    %1109 = vmatpush1.msra.mxu0 0.0
    %1110 = vmatprep.subr.mxu0 0.0
    %1111 = vmatpush1.msra.mxu0 0.0
    %1112 = vmatprep.subr.mxu0 0.0
    %1113 = vmatpush1.msra.mxu0 0.0
    %1114 = vmatprep.subr.mxu0 0.0
    %1115 = vmatpush1.msra.mxu0 0.0
    %1116 = vmatprep.subr.mxu0 0.0
    %1117 = vmatpush1.msra.mxu0 0.0
    %1118 = vmatprep.subr.mxu0 0.0
    %1119 = vmatpush1.msra.mxu0 0.0
    %1120 = vmatprep.subr.mxu0 0.0
    %1121 = vmatpush1.msra.mxu0 0.0
    %1122 = vmatprep.subr.mxu0 0.0
    %1123 = vmatpush1.msra.mxu0 0.0
    %1124 = vmatprep.subr.mxu0 0.0
    %1125 = vmatpush1.msra.mxu0 0.0
    %1126 = vmatprep.subr.mxu0 0.0
    %1127 = vmatpush1.msra.mxu0 0.0
    %1128 = vmatprep.subr.mxu0 0.0
    %1129 = vmatpush1.msra.mxu0 0.0
    %1130 = vmatprep.subr.mxu0 0.0
    %1131 = vmatpush1.msra.mxu0 0.0
    %1132 = vmatprep.subr.mxu0 0.0
    %1133 = vmatpush1.msra.mxu0 0.0
    %1134 = vmatprep.subr.mxu0 0.0
    %1135 = vmatpush1.msra.mxu0 0.0
    %1136 = vmatprep.subr.mxu0 0.0
    %1137 = vmatpush1.msra.mxu0 0.0
    %1138 = vmatprep.subr.mxu0 0.0
    %1139 = vmatpush1.msra.mxu0 0.0
    %1140 = vmatprep.mubr.f32.mxu0 0.0
    %1141 = vmatmul.mubr.f32.gmra.mrb[0].mxu0 %v1074
    %v1142 = vpop.f32.mrb[0].mxu0
    %v1143 = vadd.f32 0.0, %v1142
    %v1144 = vpop.f32.mrb[0].mxu0
    %1145 = vdwg.mxu0
    %1146 = vmatprep.subr.mxu0 0.0
    %1147 = vmatpush1.msra.mxu0 %v59
    %1148 = vmatprep.subr.mxu0 0.0
    %1149 = vmatpush1.msra.mxu0 %v60
    %1150 = vmatprep.subr.mxu0 0.0
    %1151 = vmatpush1.msra.mxu0 %v61
    %1152 = vmatprep.subr.mxu0 0.0
    %1153 = vmatpush1.msra.mxu0 %v62
    %1154 = vmatprep.subr.mxu0 0.0
    %1155 = vmatpush1.msra.mxu0 %v63
    %1156 = vmatprep.subr.mxu0 0.0
    %1157 = vmatpush1.msra.mxu0 %v64
    %1158 = vmatprep.subr.mxu0 0.0
    %1159 = vmatpush1.msra.mxu0 %v65
    %1160 = vmatprep.subr.mxu0 0.0
    %1161 = vmatpush1.msra.mxu0 %v66
    %1162 = vmatprep.subr.mxu0 0.0
    %1163 = vmatpush1.msra.mxu0 %v67
    %1164 = vmatprep.subr.mxu0 0.0
    %1165 = vmatpush1.msra.mxu0 %v68
    %1166 = vmatprep.subr.mxu0 0.0
    %1167 = vmatpush1.msra.mxu0 %v69
    %1168 = vmatprep.subr.mxu0 0.0
    %1169 = vmatpush1.msra.mxu0 %v70
    %1170 = vmatprep.subr.mxu0 0.0
    %1171 = vmatpush1.msra.mxu0 %v71
    %1172 = vmatprep.subr.mxu0 0.0
    %1173 = vmatpush1.msra.mxu0 %v72
    %1174 = vmatprep.subr.mxu0 0.0
    %1175 = vmatpush1.msra.mxu0 %v73
    %1176 = vmatprep.subr.mxu0 0.0
    %1177 = vmatpush1.msra.mxu0 %v74
    %1178 = vmatprep.subr.mxu0 0.0
    %1179 = vmatpush1.msra.mxu0 0.0
    %1180 = vmatprep.subr.mxu0 0.0
    %1181 = vmatpush1.msra.mxu0 0.0
    %1182 = vmatprep.subr.mxu0 0.0
    %1183 = vmatpush1.msra.mxu0 0.0
    %1184 = vmatprep.subr.mxu0 0.0
    %1185 = vmatpush1.msra.mxu0 0.0
    %1186 = vmatprep.subr.mxu0 0.0
    %1187 = vmatpush1.msra.mxu0 0.0
    %1188 = vmatprep.subr.mxu0 0.0
    %1189 = vmatpush1.msra.mxu0 0.0
    %1190 = vmatprep.subr.mxu0 0.0
    %1191 = vmatpush1.msra.mxu0 0.0
    %1192 = vmatprep.subr.mxu0 0.0
    %1193 = vmatpush1.msra.mxu0 0.0
    %1194 = vmatprep.subr.mxu0 0.0
    %1195 = vmatpush1.msra.mxu0 0.0
    %1196 = vmatprep.subr.mxu0 0.0
    %1197 = vmatpush1.msra.mxu0 0.0
    %1198 = vmatprep.subr.mxu0 0.0
    %1199 = vmatpush1.msra.mxu0 0.0
    %1200 = vmatprep.subr.mxu0 0.0
    %1201 = vmatpush1.msra.mxu0 0.0
    %1202 = vmatprep.subr.mxu0 0.0
    %1203 = vmatpush1.msra.mxu0 0.0
    %1204 = vmatprep.subr.mxu0 0.0
    %1205 = vmatpush1.msra.mxu0 0.0
    %1206 = vmatprep.subr.mxu0 0.0
    %1207 = vmatpush1.msra.mxu0 0.0
    %1208 = vmatprep.subr.mxu0 0.0
    %1209 = vmatpush1.msra.mxu0 0.0
    %1210 = vmatprep.mubr.f32.mxu0 0.0
    %1211 = vmatmul.mubr.f32.gmra.mrb[0].mxu0 %v90
    %v1212 = vpop.f32.mrb[0].mxu0
    %v1213 = vadd.f32 %v1143, %v1212
    %v1214 = vpop.f32.mrb[0].mxu0
    %1215 = vdwg.mxu0
    %v1216 = vlaneseq
    %v1217 = vshrl.u32 %v1216, 7
    %v1218 = vsub.s32 0, %v1217
    %v1219 = vrot.slane %v84, %v1218
    %v1220 = vadd.f32 %v1213, %v1219
    %1221 = vmatprep.subr.mxu0 0.0
    %1222 = vmatpush1.msra.mxu0 %v79
    %1223 = vmatprep.subr.mxu0 0.0
    %1224 = vmatpush1.msra.mxu0 %v80
    %1225 = vmatprep.subr.mxu0 0.0
    %1226 = vmatpush1.msra.mxu0 %v81
    %1227 = vmatprep.subr.mxu0 0.0
    %1228 = vmatpush1.msra.mxu0 %v82
    %1229 = vmatprep.subr.mxu0 0.0
    %1230 = vmatpush1.msra.mxu0 0.0
    %1231 = vmatprep.subr.mxu0 0.0
    %1232 = vmatpush1.msra.mxu0 0.0
    %1233 = vmatprep.subr.mxu0 0.0
    %1234 = vmatpush1.msra.mxu0 0.0
    %1235 = vmatprep.subr.mxu0 0.0
    %1236 = vmatpush1.msra.mxu0 0.0
    %1237 = vmatprep.subr.mxu0 0.0
    %1238 = vmatpush1.msra.mxu0 0.0
    %1239 = vmatprep.subr.mxu0 0.0
    %1240 = vmatpush1.msra.mxu0 0.0
    %1241 = vmatprep.subr.mxu0 0.0
    %1242 = vmatpush1.msra.mxu0 0.0
    %1243 = vmatprep.subr.mxu0 0.0
    %1244 = vmatpush1.msra.mxu0 0.0
    %1245 = vmatprep.subr.mxu0 0.0
    %1246 = vmatpush1.msra.mxu0 0.0
    %1247 = vmatprep.subr.mxu0 0.0
    %1248 = vmatpush1.msra.mxu0 0.0
    %1249 = vmatprep.subr.mxu0 0.0
    %1250 = vmatpush1.msra.mxu0 0.0
    %1251 = vmatprep.subr.mxu0 0.0
    %1252 = vmatpush1.msra.mxu0 0.0
    %1253 = vmatprep.subr.mxu0 0.0
    %1254 = vmatpush1.msra.mxu0 0.0
    %1255 = vmatprep.subr.mxu0 0.0
    %1256 = vmatpush1.msra.mxu0 0.0
    %1257 = vmatprep.subr.mxu0 0.0
    %1258 = vmatpush1.msra.mxu0 0.0
    %1259 = vmatprep.subr.mxu0 0.0
    %1260 = vmatpush1.msra.mxu0 0.0
    %1261 = vmatprep.subr.mxu0 0.0
    %1262 = vmatpush1.msra.mxu0 0.0
    %1263 = vmatprep.subr.mxu0 0.0
    %1264 = vmatpush1.msra.mxu0 0.0
    %1265 = vmatprep.subr.mxu0 0.0
    %1266 = vmatpush1.msra.mxu0 0.0
    %1267 = vmatprep.subr.mxu0 0.0
    %1268 = vmatpush1.msra.mxu0 0.0
    %1269 = vmatprep.subr.mxu0 0.0
    %1270 = vmatpush1.msra.mxu0 0.0
    %1271 = vmatprep.subr.mxu0 0.0
    %1272 = vmatpush1.msra.mxu0 0.0
    %1273 = vmatprep.subr.mxu0 0.0
    %1274 = vmatpush1.msra.mxu0 0.0
    %1275 = vmatprep.subr.mxu0 0.0
    %1276 = vmatpush1.msra.mxu0 0.0
    %1277 = vmatprep.subr.mxu0 0.0
    %1278 = vmatpush1.msra.mxu0 0.0
    %1279 = vmatprep.subr.mxu0 0.0
    %1280 = vmatpush1.msra.mxu0 0.0
    %1281 = vmatprep.subr.mxu0 0.0
    %1282 = vmatpush1.msra.mxu0 0.0
    %1283 = vmatprep.subr.mxu0 0.0
    %1284 = vmatpush1.msra.mxu0 0.0
    %1285 = vmatprep.mubr.f32.mxu0 0.0
    %1286 = vmatmul.mubr.f32.gmra.mrb[0].mxu0 %v211
    %v1287 = vpop.f32.mrb[0].mxu0
    %v1288 = vadd.f32 0.0, %v1287
    %v1289 = vpop.f32.mrb[0].mxu0
    %1290 = vdwg.mxu0
    %v1291 = vadd.f32 %v1220, %v1288
    %v1292 = vmul.f32 %v1291, 0.5
    %v1293 = vtanh.pop %v1292
    %v1294 = vmul.f32 %v1293, 0.5
    %v1295 = vadd.f32 %v1294, 0.5
    %v1296 = vtanh.pop %v1291
    %1297 = vrot.lane.b32.xlu0 %v1296, 64
    %v1298 = vpop.permute.xlu0 %1297
    %v1299 = vmul.f32 %v1295, 0.0
    %v1300 = vmul.f32 %v1295, %v1298
    %1302 = vrot.lane.b32.xlu0 %v1300, 96
    %v1303 = vpop.permute.xlu0 %1302
    %v1305 = vadd.f32 %v1299, %v1303
    %v1306 = vtanh.pop %v1305
    %1308 = vrot.lane.b32.xlu0 %v1306, 64
    %v1309 = vpop.permute.xlu0 %1308
    %v1311 = vmul.f32 %v1295, %v1309
    %1313 = vrot.lane.b32.xlu0 %v1311, 96
    %v1314 = vpop.permute.xlu0 %1313
    %vm1316 = vcmask 253952
    %1317 = vst.msk [vmem:[#allocation2] sm:$0x1] %vm1316, %v1314
    %v1318 = vsel %vm209, %v1314, 0
    %1320 = vmatprep.subr.mxu0 0.0
    %1321 = vmatpush1.msra.mxu0 %v79
    %1322 = vmatprep.subr.mxu0 0.0
    %1323 = vmatpush1.msra.mxu0 %v80
    %1324 = vmatprep.subr.mxu0 0.0
    %1325 = vmatpush1.msra.mxu0 %v81
    %1326 = vmatprep.subr.mxu0 0.0
    %1327 = vmatpush1.msra.mxu0 %v82
    %1328 = vmatprep.subr.mxu0 0.0
    %1329 = vmatpush1.msra.mxu0 0.0
    %1330 = vmatprep.subr.mxu0 0.0
    %1331 = vmatpush1.msra.mxu0 0.0
    %1332 = vmatprep.subr.mxu0 0.0
    %1333 = vmatpush1.msra.mxu0 0.0
    %1334 = vmatprep.subr.mxu0 0.0
    %1335 = vmatpush1.msra.mxu0 0.0
    %1336 = vmatprep.subr.mxu0 0.0
    %1337 = vmatpush1.msra.mxu0 0.0
    %1338 = vmatprep.subr.mxu0 0.0
    %1339 = vmatpush1.msra.mxu0 0.0
    %1340 = vmatprep.subr.mxu0 0.0
    %1341 = vmatpush1.msra.mxu0 0.0
    %1342 = vmatprep.subr.mxu0 0.0
    %1343 = vmatpush1.msra.mxu0 0.0
    %1344 = vmatprep.subr.mxu0 0.0
    %1345 = vmatpush1.msra.mxu0 0.0
    %1346 = vmatprep.subr.mxu0 0.0
    %1347 = vmatpush1.msra.mxu0 0.0
    %1348 = vmatprep.subr.mxu0 0.0
    %1349 = vmatpush1.msra.mxu0 0.0
    %1350 = vmatprep.subr.mxu0 0.0
    %1351 = vmatpush1.msra.mxu0 0.0
    %1352 = vmatprep.subr.mxu0 0.0
    %1353 = vmatpush1.msra.mxu0 0.0
    %1354 = vmatprep.subr.mxu0 0.0
    %1355 = vmatpush1.msra.mxu0 0.0
    %1356 = vmatprep.subr.mxu0 0.0
    %1357 = vmatpush1.msra.mxu0 0.0
    %1358 = vmatprep.subr.mxu0 0.0
    %1359 = vmatpush1.msra.mxu0 0.0
    %1360 = vmatprep.subr.mxu0 0.0
    %1361 = vmatpush1.msra.mxu0 0.0
    %1362 = vmatprep.subr.mxu0 0.0
    %1363 = vmatpush1.msra.mxu0 0.0
    %1364 = vmatprep.subr.mxu0 0.0
    %1365 = vmatpush1.msra.mxu0 0.0
    %1366 = vmatprep.subr.mxu0 0.0
    %1367 = vmatpush1.msra.mxu0 0.0
    %1368 = vmatprep.subr.mxu0 0.0
    %1369 = vmatpush1.msra.mxu0 0.0
    %1370 = vmatprep.subr.mxu0 0.0
    %1371 = vmatpush1.msra.mxu0 0.0
    %1372 = vmatprep.subr.mxu0 0.0
    %1373 = vmatpush1.msra.mxu0 0.0
    %1374 = vmatprep.subr.mxu0 0.0
    %1375 = vmatpush1.msra.mxu0 0.0
    %1376 = vmatprep.subr.mxu0 0.0
    %1377 = vmatpush1.msra.mxu0 0.0
    %1378 = vmatprep.subr.mxu0 0.0
    %1379 = vmatpush1.msra.mxu0 0.0
    %1380 = vmatprep.subr.mxu0 0.0
    %1381 = vmatpush1.msra.mxu0 0.0
    %1382 = vmatprep.subr.mxu0 0.0
    %1383 = vmatpush1.msra.mxu0 0.0
    %1384 = vmatprep.mubr.f32.mxu0 0.0
    %1385 = vmatmul.mubr.f32.gmra.mrb[0].mxu0 %v1318
    %v1386 = vpop.f32.mrb[0].mxu0
    %v1387 = vadd.f32 0.0, %v1386
    %v1388 = vpop.f32.mrb[0].mxu0
    %1389 = vdwg.mxu0
    %v1391 = vrot.slane %v1387, 7
    %v1393 = vadd.f32 %v1220, %v1391
    %v1394 = vmul.f32 %v1393, 0.5
    %v1395 = vtanh.pop %v1394
    %v1396 = vmul.f32 %v1395, 0.5
    %v1397 = vadd.f32 %v1396, 0.5
    %v1398 = vtanh.pop %v1393
    %v1400 = vrot.slane %v1398, 1
    %1402 = vrot.lane.b32.xlu0 %v1400, 64
    %v1403 = vpop.permute.xlu0 %1402
    %v1405 = vrot.slane %v1305, 7
    %v1407 = vmul.f32 %v1397, %v1405
    %v1409 = vrot.slane %v1403, 7
    %v1411 = vmul.f32 %v1397, %v1409
    %1413 = vrot.lane.b32.xlu0 %v1411, 96
    %v1414 = vpop.permute.xlu0 %1413
    %v1416 = vadd.f32 %v1407, %v1414
    %v1417 = vtanh.pop %v1416
    %1419 = vrot.lane.b32.xlu0 %v1417, 64
    %v1420 = vpop.permute.xlu0 %1419
    %v1422 = vmul.f32 %v1397, %v1420
    %1424 = vrot.lane.b32.xlu0 %v1422, 96
    %v1425 = vpop.permute.xlu0 %1424
    %vm1427 = vcmask 254977
    %1428 = vst.msk [vmem:[#allocation2] sm:$0x2] %vm1427, %v1425
    %v1429 = vrot.slane %v1422, 1
    %1430 = vrot.lane.b32.xlu0 %v1429, 96
    %v1431 = vpop.permute.xlu0 %1430
    %v1432 = vsel %vm209, %v1431, 0
    %1434 = vmatprep.subr.mxu0 0.0
    %1435 = vmatpush1.msra.mxu0 %v79
    %1436 = vmatprep.subr.mxu0 0.0
    %1437 = vmatpush1.msra.mxu0 %v80
    %1438 = vmatprep.subr.mxu0 0.0
    %1439 = vmatpush1.msra.mxu0 %v81
    %1440 = vmatprep.subr.mxu0 0.0
    %1441 = vmatpush1.msra.mxu0 %v82
    %1442 = vmatprep.subr.mxu0 0.0
    %1443 = vmatpush1.msra.mxu0 0.0
    %1444 = vmatprep.subr.mxu0 0.0
    %1445 = vmatpush1.msra.mxu0 0.0
    %1446 = vmatprep.subr.mxu0 0.0
    %1447 = vmatpush1.msra.mxu0 0.0
    %1448 = vmatprep.subr.mxu0 0.0
    %1449 = vmatpush1.msra.mxu0 0.0
    %1450 = vmatprep.subr.mxu0 0.0
    %1451 = vmatpush1.msra.mxu0 0.0
    %1452 = vmatprep.subr.mxu0 0.0
    %1453 = vmatpush1.msra.mxu0 0.0
    %1454 = vmatprep.subr.mxu0 0.0
    %1455 = vmatpush1.msra.mxu0 0.0
    %1456 = vmatprep.subr.mxu0 0.0
    %1457 = vmatpush1.msra.mxu0 0.0
    %1458 = vmatprep.subr.mxu0 0.0
    %1459 = vmatpush1.msra.mxu0 0.0
    %1460 = vmatprep.subr.mxu0 0.0
    %1461 = vmatpush1.msra.mxu0 0.0
    %1462 = vmatprep.subr.mxu0 0.0
    %1463 = vmatpush1.msra.mxu0 0.0
    %1464 = vmatprep.subr.mxu0 0.0
    %1465 = vmatpush1.msra.mxu0 0.0
    %1466 = vmatprep.subr.mxu0 0.0
    %1467 = vmatpush1.msra.mxu0 0.0
    %1468 = vmatprep.subr.mxu0 0.0
    %1469 = vmatpush1.msra.mxu0 0.0
    %1470 = vmatprep.subr.mxu0 0.0
    %1471 = vmatpush1.msra.mxu0 0.0
    %1472 = vmatprep.subr.mxu0 0.0
    %1473 = vmatpush1.msra.mxu0 0.0
    %1474 = vmatprep.subr.mxu0 0.0
    %1475 = vmatpush1.msra.mxu0 0.0
    %1476 = vmatprep.subr.mxu0 0.0
    %1477 = vmatpush1.msra.mxu0 0.0
    %1478 = vmatprep.subr.mxu0 0.0
    %1479 = vmatpush1.msra.mxu0 0.0
    %1480 = vmatprep.subr.mxu0 0.0
    %1481 = vmatpush1.msra.mxu0 0.0
    %1482 = vmatprep.subr.mxu0 0.0
    %1483 = vmatpush1.msra.mxu0 0.0
    %1484 = vmatprep.subr.mxu0 0.0
    %1485 = vmatpush1.msra.mxu0 0.0
    %1486 = vmatprep.subr.mxu0 0.0
    %1487 = vmatpush1.msra.mxu0 0.0
    %1488 = vmatprep.subr.mxu0 0.0
    %1489 = vmatpush1.msra.mxu0 0.0
    %1490 = vmatprep.subr.mxu0 0.0
    %1491 = vmatpush1.msra.mxu0 0.0
    %1492 = vmatprep.subr.mxu0 0.0
    %1493 = vmatpush1.msra.mxu0 0.0
    %1494 = vmatprep.subr.mxu0 0.0
    %1495 = vmatpush1.msra.mxu0 0.0
    %1496 = vmatprep.subr.mxu0 0.0
    %1497 = vmatpush1.msra.mxu0 0.0
    %1498 = vmatprep.mubr.f32.mxu0 0.0
    %1499 = vmatmul.mubr.f32.gmra.mrb[0].mxu0 %v1432
    %v1500 = vpop.f32.mrb[0].mxu0
    %v1501 = vadd.f32 0.0, %v1500
    %v1502 = vpop.f32.mrb[0].mxu0
    %1503 = vdwg.mxu0
    %v1505 = vrot.slane %v1501, 6
    %v1507 = vadd.f32 %v1220, %v1505
    %v1508 = vmul.f32 %v1507, 0.5
    %v1509 = vtanh.pop %v1508
    %v1510 = vmul.f32 %v1509, 0.5
    %v1511 = vadd.f32 %v1510, 0.5
    %v1512 = vtanh.pop %v1507
    %v1514 = vrot.slane %v1512, 2
    %1516 = vrot.lane.b32.xlu0 %v1514, 64
    %v1517 = vpop.permute.xlu0 %1516
    %v1519 = vrot.slane %v1416, 7
    %v1521 = vmul.f32 %v1511, %v1519
    %v1523 = vrot.slane %v1517, 6
    %v1525 = vmul.f32 %v1511, %v1523
    %1527 = vrot.lane.b32.xlu0 %v1525, 96
    %v1528 = vpop.permute.xlu0 %1527
    %v1530 = vadd.f32 %v1521, %v1528
    %v1531 = vtanh.pop %v1530
    %1533 = vrot.lane.b32.xlu0 %v1531, 64
    %v1534 = vpop.permute.xlu0 %1533
    %v1536 = vmul.f32 %v1511, %v1534
    %1538 = vrot.lane.b32.xlu0 %v1536, 96
    %v1539 = vpop.permute.xlu0 %1538
    %vm1541 = vcmask 256002
    %1542 = vst.msk [vmem:[#allocation2] sm:$0x4] %vm1541, %v1539
    %v1543 = vrot.slane %v1536, 2
    %1544 = vrot.lane.b32.xlu0 %v1543, 96
    %v1545 = vpop.permute.xlu0 %1544
    %v1546 = vsel %vm209, %v1545, 0
    %1548 = vmatprep.subr.mxu0 0.0
    %1549 = vmatpush1.msra.mxu0 %v79
    %1550 = vmatprep.subr.mxu0 0.0
    %1551 = vmatpush1.msra.mxu0 %v80
    %1552 = vmatprep.subr.mxu0 0.0
    %1553 = vmatpush1.msra.mxu0 %v81
    %1554 = vmatprep.subr.mxu0 0.0
    %1555 = vmatpush1.msra.mxu0 %v82
    %1556 = vmatprep.subr.mxu0 0.0
    %1557 = vmatpush1.msra.mxu0 0.0
    %1558 = vmatprep.subr.mxu0 0.0
    %1559 = vmatpush1.msra.mxu0 0.0
    %1560 = vmatprep.subr.mxu0 0.0
    %1561 = vmatpush1.msra.mxu0 0.0
    %1562 = vmatprep.subr.mxu0 0.0
    %1563 = vmatpush1.msra.mxu0 0.0
    %1564 = vmatprep.subr.mxu0 0.0
    %1565 = vmatpush1.msra.mxu0 0.0
    %1566 = vmatprep.subr.mxu0 0.0
    %1567 = vmatpush1.msra.mxu0 0.0
    %1568 = vmatprep.subr.mxu0 0.0
    %1569 = vmatpush1.msra.mxu0 0.0
    %1570 = vmatprep.subr.mxu0 0.0
    %1571 = vmatpush1.msra.mxu0 0.0
    %1572 = vmatprep.subr.mxu0 0.0
    %1573 = vmatpush1.msra.mxu0 0.0
    %1574 = vmatprep.subr.mxu0 0.0
    %1575 = vmatpush1.msra.mxu0 0.0
    %1576 = vmatprep.subr.mxu0 0.0
    %1577 = vmatpush1.msra.mxu0 0.0
    %1578 = vmatprep.subr.mxu0 0.0
    %1579 = vmatpush1.msra.mxu0 0.0
    %1580 = vmatprep.subr.mxu0 0.0
    %1581 = vmatpush1.msra.mxu0 0.0
    %1582 = vmatprep.subr.mxu0 0.0
    %1583 = vmatpush1.msra.mxu0 0.0
    %1584 = vmatprep.subr.mxu0 0.0
    %1585 = vmatpush1.msra.mxu0 0.0
    %1586 = vmatprep.subr.mxu0 0.0
    %1587 = vmatpush1.msra.mxu0 0.0
    %1588 = vmatprep.subr.mxu0 0.0
    %1589 = vmatpush1.msra.mxu0 0.0
    %1590 = vmatprep.subr.mxu0 0.0
    %1591 = vmatpush1.msra.mxu0 0.0
    %1592 = vmatprep.subr.mxu0 0.0
    %1593 = vmatpush1.msra.mxu0 0.0
    %1594 = vmatprep.subr.mxu0 0.0
    %1595 = vmatpush1.msra.mxu0 0.0
    %1596 = vmatprep.subr.mxu0 0.0
    %1597 = vmatpush1.msra.mxu0 0.0
    %1598 = vmatprep.subr.mxu0 0.0
    %1599 = vmatpush1.msra.mxu0 0.0
    %1600 = vmatprep.subr.mxu0 0.0
    %1601 = vmatpush1.msra.mxu0 0.0
    %1602 = vmatprep.subr.mxu0 0.0
    %1603 = vmatpush1.msra.mxu0 0.0
    %1604 = vmatprep.subr.mxu0 0.0
    %1605 = vmatpush1.msra.mxu0 0.0
    %1606 = vmatprep.subr.mxu0 0.0
    %1607 = vmatpush1.msra.mxu0 0.0
    %1608 = vmatprep.subr.mxu0 0.0
    %1609 = vmatpush1.msra.mxu0 0.0
    %1610 = vmatprep.subr.mxu0 0.0
    %1611 = vmatpush1.msra.mxu0 0.0
    %1612 = vmatprep.mubr.f32.mxu0 0.0
    %1613 = vmatmul.mubr.f32.gmra.mrb[0].mxu0 %v1546
    %v1614 = vpop.f32.mrb[0].mxu0
    %v1615 = vadd.f32 0.0, %v1614
    %v1616 = vpop.f32.mrb[0].mxu0
    %1617 = vdwg.mxu0
    %v1619 = vrot.slane %v1615, 5
    %v1621 = vadd.f32 %v1220, %v1619
    %v1622 = vmul.f32 %v1621, 0.5
    %v1623 = vtanh.pop %v1622
    %v1624 = vmul.f32 %v1623, 0.5
    %v1625 = vadd.f32 %v1624, 0.5
    %v1626 = vtanh.pop %v1621
    %v1628 = vrot.slane %v1626, 3
    %1630 = vrot.lane.b32.xlu0 %v1628, 64
    %v1631 = vpop.permute.xlu0 %1630
    %v1633 = vrot.slane %v1530, 7
    %v1635 = vmul.f32 %v1625, %v1633
    %v1637 = vrot.slane %v1631, 5
    %v1639 = vmul.f32 %v1625, %v1637
    %1641 = vrot.lane.b32.xlu0 %v1639, 96
    %v1642 = vpop.permute.xlu0 %1641
    %v1644 = vadd.f32 %v1635, %v1642
    %v1645 = vtanh.pop %v1644
    %1647 = vrot.lane.b32.xlu0 %v1645, 64
    %v1648 = vpop.permute.xlu0 %1647
    %v1650 = vmul.f32 %v1625, %v1648
    %1652 = vrot.lane.b32.xlu0 %v1650, 96
    %v1653 = vpop.permute.xlu0 %1652
    %vm1655 = vcmask 257027
    %1656 = vst.msk [vmem:[#allocation2] sm:$0x8] %vm1655, %v1653
    %v1657 = vrot.slane %v1650, 3
    %1658 = vrot.lane.b32.xlu0 %v1657, 96
    %v1659 = vpop.permute.xlu0 %1658
    %v1660 = vsel %vm209, %v1659, 0
    %1662 = vmatprep.subr.mxu0 0.0
    %1663 = vmatpush1.msra.mxu0 %v79
    %1664 = vmatprep.subr.mxu0 0.0
    %1665 = vmatpush1.msra.mxu0 %v80
    %1666 = vmatprep.subr.mxu0 0.0
    %1667 = vmatpush1.msra.mxu0 %v81
    %1668 = vmatprep.subr.mxu0 0.0
    %1669 = vmatpush1.msra.mxu0 %v82
    %1670 = vmatprep.subr.mxu0 0.0
    %1671 = vmatpush1.msra.mxu0 0.0
    %1672 = vmatprep.subr.mxu0 0.0
    %1673 = vmatpush1.msra.mxu0 0.0
    %1674 = vmatprep.subr.mxu0 0.0
    %1675 = vmatpush1.msra.mxu0 0.0
    %1676 = vmatprep.subr.mxu0 0.0
    %1677 = vmatpush1.msra.mxu0 0.0
    %1678 = vmatprep.subr.mxu0 0.0
    %1679 = vmatpush1.msra.mxu0 0.0
    %1680 = vmatprep.subr.mxu0 0.0
    %1681 = vmatpush1.msra.mxu0 0.0
    %1682 = vmatprep.subr.mxu0 0.0
    %1683 = vmatpush1.msra.mxu0 0.0
    %1684 = vmatprep.subr.mxu0 0.0
    %1685 = vmatpush1.msra.mxu0 0.0
    %1686 = vmatprep.subr.mxu0 0.0
    %1687 = vmatpush1.msra.mxu0 0.0
    %1688 = vmatprep.subr.mxu0 0.0
    %1689 = vmatpush1.msra.mxu0 0.0
    %1690 = vmatprep.subr.mxu0 0.0
    %1691 = vmatpush1.msra.mxu0 0.0
    %1692 = vmatprep.subr.mxu0 0.0
    %1693 = vmatpush1.msra.mxu0 0.0
    %1694 = vmatprep.subr.mxu0 0.0
    %1695 = vmatpush1.msra.mxu0 0.0
    %1696 = vmatprep.subr.mxu0 0.0
    %1697 = vmatpush1.msra.mxu0 0.0
    %1698 = vmatprep.subr.mxu0 0.0
    %1699 = vmatpush1.msra.mxu0 0.0
    %1700 = vmatprep.subr.mxu0 0.0
    %1701 = vmatpush1.msra.mxu0 0.0
    %1702 = vmatprep.subr.mxu0 0.0
    %1703 = vmatpush1.msra.mxu0 0.0
    %1704 = vmatprep.subr.mxu0 0.0
    %1705 = vmatpush1.msra.mxu0 0.0
    %1706 = vmatprep.subr.mxu0 0.0
    %1707 = vmatpush1.msra.mxu0 0.0
    %1708 = vmatprep.subr.mxu0 0.0
    %1709 = vmatpush1.msra.mxu0 0.0
    %1710 = vmatprep.subr.mxu0 0.0
    %1711 = vmatpush1.msra.mxu0 0.0
    %1712 = vmatprep.subr.mxu0 0.0
    %1713 = vmatpush1.msra.mxu0 0.0
    %1714 = vmatprep.subr.mxu0 0.0
    %1715 = vmatpush1.msra.mxu0 0.0
    %1716 = vmatprep.subr.mxu0 0.0
    %1717 = vmatpush1.msra.mxu0 0.0
    %1718 = vmatprep.subr.mxu0 0.0
    %1719 = vmatpush1.msra.mxu0 0.0
    %1720 = vmatprep.subr.mxu0 0.0
    %1721 = vmatpush1.msra.mxu0 0.0
    %1722 = vmatprep.subr.mxu0 0.0
    %1723 = vmatpush1.msra.mxu0 0.0
    %1724 = vmatprep.subr.mxu0 0.0
    %1725 = vmatpush1.msra.mxu0 0.0
    %1726 = vmatprep.mubr.f32.mxu0 0.0
    %1727 = vmatmul.mubr.f32.gmra.mrb[0].mxu0 %v1660
    %v1728 = vpop.f32.mrb[0].mxu0
    %v1729 = vadd.f32 0.0, %v1728
    %v1730 = vpop.f32.mrb[0].mxu0
    %1731 = vdwg.mxu0
    %v1733 = vrot.slane %v1729, 4
    %v1735 = vadd.f32 %v1220, %v1733
    %v1736 = vmul.f32 %v1735, 0.5
    %v1737 = vtanh.pop %v1736
    %v1738 = vmul.f32 %v1737, 0.5
    %v1739 = vadd.f32 %v1738, 0.5
    %v1740 = vtanh.pop %v1735
    %v1742 = vrot.slane %v1740, 4
    %1744 = vrot.lane.b32.xlu0 %v1742, 64
    %v1745 = vpop.permute.xlu0 %1744
    %v1747 = vrot.slane %v1644, 7
    %v1749 = vmul.f32 %v1739, %v1747
    %v1751 = vrot.slane %v1745, 4
    %v1753 = vmul.f32 %v1739, %v1751
    %1755 = vrot.lane.b32.xlu0 %v1753, 96
    %v1756 = vpop.permute.xlu0 %1755
    %v1758 = vadd.f32 %v1749, %v1756
    %v1759 = vtanh.pop %v1758
    %1761 = vrot.lane.b32.xlu0 %v1759, 64
    %v1762 = vpop.permute.xlu0 %1761
    %v1764 = vmul.f32 %v1739, %v1762
    %1766 = vrot.lane.b32.xlu0 %v1764, 96
    %v1767 = vpop.permute.xlu0 %1766
    %vm1769 = vcmask 258052
    %1770 = vst.msk [vmem:[#allocation2] sm:$0x10] %vm1769, %v1767
    %v1771 = vrot.slane %v1764, 4
    %1772 = vrot.lane.b32.xlu0 %v1771, 96
    %v1773 = vpop.permute.xlu0 %1772
    %v1774 = vsel %vm209, %v1773, 0
    %1776 = vmatprep.subr.mxu0 0.0
    %1777 = vmatpush1.msra.mxu0 %v79
    %1778 = vmatprep.subr.mxu0 0.0
    %1779 = vmatpush1.msra.mxu0 %v80
    %1780 = vmatprep.subr.mxu0 0.0
    %1781 = vmatpush1.msra.mxu0 %v81
    %1782 = vmatprep.subr.mxu0 0.0
    %1783 = vmatpush1.msra.mxu0 %v82
    %1784 = vmatprep.subr.mxu0 0.0
    %1785 = vmatpush1.msra.mxu0 0.0
    %1786 = vmatprep.subr.mxu0 0.0
    %1787 = vmatpush1.msra.mxu0 0.0
    %1788 = vmatprep.subr.mxu0 0.0
    %1789 = vmatpush1.msra.mxu0 0.0
    %1790 = vmatprep.subr.mxu0 0.0
    %1791 = vmatpush1.msra.mxu0 0.0
    %1792 = vmatprep.subr.mxu0 0.0
    %1793 = vmatpush1.msra.mxu0 0.0
    %1794 = vmatprep.subr.mxu0 0.0
    %1795 = vmatpush1.msra.mxu0 0.0
    %1796 = vmatprep.subr.mxu0 0.0
    %1797 = vmatpush1.msra.mxu0 0.0
    %1798 = vmatprep.subr.mxu0 0.0
    %1799 = vmatpush1.msra.mxu0 0.0
    %1800 = vmatprep.subr.mxu0 0.0
    %1801 = vmatpush1.msra.mxu0 0.0
    %1802 = vmatprep.subr.mxu0 0.0
    %1803 = vmatpush1.msra.mxu0 0.0
    %1804 = vmatprep.subr.mxu0 0.0
    %1805 = vmatpush1.msra.mxu0 0.0
    %1806 = vmatprep.subr.mxu0 0.0
    %1807 = vmatpush1.msra.mxu0 0.0
    %1808 = vmatprep.subr.mxu0 0.0
    %1809 = vmatpush1.msra.mxu0 0.0
    %1810 = vmatprep.subr.mxu0 0.0
    %1811 = vmatpush1.msra.mxu0 0.0
    %1812 = vmatprep.subr.mxu0 0.0
    %1813 = vmatpush1.msra.mxu0 0.0
    %1814 = vmatprep.subr.mxu0 0.0
    %1815 = vmatpush1.msra.mxu0 0.0
    %1816 = vmatprep.subr.mxu0 0.0
    %1817 = vmatpush1.msra.mxu0 0.0
    %1818 = vmatprep.subr.mxu0 0.0
    %1819 = vmatpush1.msra.mxu0 0.0
    %1820 = vmatprep.subr.mxu0 0.0
    %1821 = vmatpush1.msra.mxu0 0.0
    %1822 = vmatprep.subr.mxu0 0.0
    %1823 = vmatpush1.msra.mxu0 0.0
    %1824 = vmatprep.subr.mxu0 0.0
    %1825 = vmatpush1.msra.mxu0 0.0
    %1826 = vmatprep.subr.mxu0 0.0
    %1827 = vmatpush1.msra.mxu0 0.0
    %1828 = vmatprep.subr.mxu0 0.0
    %1829 = vmatpush1.msra.mxu0 0.0
    %1830 = vmatprep.subr.mxu0 0.0
    %1831 = vmatpush1.msra.mxu0 0.0
    %1832 = vmatprep.subr.mxu0 0.0
    %1833 = vmatpush1.msra.mxu0 0.0
    %1834 = vmatprep.subr.mxu0 0.0
    %1835 = vmatpush1.msra.mxu0 0.0
    %1836 = vmatprep.subr.mxu0 0.0
    %1837 = vmatpush1.msra.mxu0 0.0
    %1838 = vmatprep.subr.mxu0 0.0
    %1839 = vmatpush1.msra.mxu0 0.0
    %1840 = vmatprep.mubr.f32.mxu0 0.0
    %1841 = vmatmul.mubr.f32.gmra.mrb[0].mxu0 %v1774
    %v1842 = vpop.f32.mrb[0].mxu0
    %v1843 = vadd.f32 0.0, %v1842
    %v1844 = vpop.f32.mrb[0].mxu0
    %1845 = vdwg.mxu0
    %v1847 = vrot.slane %v1843, 3
    %v1849 = vadd.f32 %v1220, %v1847
    %v1850 = vmul.f32 %v1849, 0.5
    %v1851 = vtanh.pop %v1850
    %v1852 = vmul.f32 %v1851, 0.5
    %v1853 = vadd.f32 %v1852, 0.5
    %v1854 = vtanh.pop %v1849
    %v1856 = vrot.slane %v1854, 5
    %1858 = vrot.lane.b32.xlu0 %v1856, 64
    %v1859 = vpop.permute.xlu0 %1858
    %v1861 = vrot.slane %v1758, 7
    %v1863 = vmul.f32 %v1853, %v1861
    %v1865 = vrot.slane %v1859, 3
    %v1867 = vmul.f32 %v1853, %v1865
    %1869 = vrot.lane.b32.xlu0 %v1867, 96
    %v1870 = vpop.permute.xlu0 %1869
    %v1872 = vadd.f32 %v1863, %v1870
    %v1873 = vtanh.pop %v1872
    %1875 = vrot.lane.b32.xlu0 %v1873, 64
    %v1876 = vpop.permute.xlu0 %1875
    %v1878 = vmul.f32 %v1853, %v1876
    %1880 = vrot.lane.b32.xlu0 %v1878, 96
    %v1881 = vpop.permute.xlu0 %1880
    %vm1883 = vcmask 259077
    %1884 = vst.msk [vmem:[#allocation2] sm:$0x20] %vm1883, %v1881
    %v1885 = vrot.slane %v1878, 5
    %1886 = vrot.lane.b32.xlu0 %v1885, 96
    %v1887 = vpop.permute.xlu0 %1886
    %v1888 = vsel %vm209, %v1887, 0
    %1890 = vmatprep.subr.mxu0 0.0
    %1891 = vmatpush1.msra.mxu0 %v79
    %1892 = vmatprep.subr.mxu0 0.0
    %1893 = vmatpush1.msra.mxu0 %v80
    %1894 = vmatprep.subr.mxu0 0.0
    %1895 = vmatpush1.msra.mxu0 %v81
    %1896 = vmatprep.subr.mxu0 0.0
    %1897 = vmatpush1.msra.mxu0 %v82
    %1898 = vmatprep.subr.mxu0 0.0
    %1899 = vmatpush1.msra.mxu0 0.0
    %1900 = vmatprep.subr.mxu0 0.0
    %1901 = vmatpush1.msra.mxu0 0.0
    %1902 = vmatprep.subr.mxu0 0.0
    %1903 = vmatpush1.msra.mxu0 0.0
    %1904 = vmatprep.subr.mxu0 0.0
    %1905 = vmatpush1.msra.mxu0 0.0
    %1906 = vmatprep.subr.mxu0 0.0
    %1907 = vmatpush1.msra.mxu0 0.0
    %1908 = vmatprep.subr.mxu0 0.0
    %1909 = vmatpush1.msra.mxu0 0.0
    %1910 = vmatprep.subr.mxu0 0.0
    %1911 = vmatpush1.msra.mxu0 0.0
    %1912 = vmatprep.subr.mxu0 0.0
    %1913 = vmatpush1.msra.mxu0 0.0
    %1914 = vmatprep.subr.mxu0 0.0
    %1915 = vmatpush1.msra.mxu0 0.0
    %1916 = vmatprep.subr.mxu0 0.0
    %1917 = vmatpush1.msra.mxu0 0.0
    %1918 = vmatprep.subr.mxu0 0.0
    %1919 = vmatpush1.msra.mxu0 0.0
    %1920 = vmatprep.subr.mxu0 0.0
    %1921 = vmatpush1.msra.mxu0 0.0
    %1922 = vmatprep.subr.mxu0 0.0
    %1923 = vmatpush1.msra.mxu0 0.0
    %1924 = vmatprep.subr.mxu0 0.0
    %1925 = vmatpush1.msra.mxu0 0.0
    %1926 = vmatprep.subr.mxu0 0.0
    %1927 = vmatpush1.msra.mxu0 0.0
    %1928 = vmatprep.subr.mxu0 0.0
    %1929 = vmatpush1.msra.mxu0 0.0
    %1930 = vmatprep.subr.mxu0 0.0
    %1931 = vmatpush1.msra.mxu0 0.0
    %1932 = vmatprep.subr.mxu0 0.0
    %1933 = vmatpush1.msra.mxu0 0.0
    %1934 = vmatprep.subr.mxu0 0.0
    %1935 = vmatpush1.msra.mxu0 0.0
    %1936 = vmatprep.subr.mxu0 0.0
    %1937 = vmatpush1.msra.mxu0 0.0
    %1938 = vmatprep.subr.mxu0 0.0
    %1939 = vmatpush1.msra.mxu0 0.0
    %1940 = vmatprep.subr.mxu0 0.0
    %1941 = vmatpush1.msra.mxu0 0.0
    %1942 = vmatprep.subr.mxu0 0.0
    %1943 = vmatpush1.msra.mxu0 0.0
    %1944 = vmatprep.subr.mxu0 0.0
    %1945 = vmatpush1.msra.mxu0 0.0
    %1946 = vmatprep.subr.mxu0 0.0
    %1947 = vmatpush1.msra.mxu0 0.0
    %1948 = vmatprep.subr.mxu0 0.0
    %1949 = vmatpush1.msra.mxu0 0.0
    %1950 = vmatprep.subr.mxu0 0.0
    %1951 = vmatpush1.msra.mxu0 0.0
    %1952 = vmatprep.subr.mxu0 0.0
    %1953 = vmatpush1.msra.mxu0 0.0
    %1954 = vmatprep.mubr.f32.mxu0 0.0
    %1955 = vmatmul.mubr.f32.gmra.mrb[0].mxu0 %v1888
    %v1956 = vpop.f32.mrb[0].mxu0
    %v1957 = vadd.f32 0.0, %v1956
    %v1958 = vpop.f32.mrb[0].mxu0
    %1959 = vdwg.mxu0
    %v1961 = vrot.slane %v1957, 2
    %v1963 = vadd.f32 %v1220, %v1961
    %v1964 = vmul.f32 %v1963, 0.5
    %v1965 = vtanh.pop %v1964
    %v1966 = vmul.f32 %v1965, 0.5
    %v1967 = vadd.f32 %v1966, 0.5
    %v1968 = vtanh.pop %v1963
    %v1970 = vrot.slane %v1968, 6
    %1972 = vrot.lane.b32.xlu0 %v1970, 64
    %v1973 = vpop.permute.xlu0 %1972
    %v1975 = vrot.slane %v1872, 7
    %v1977 = vmul.f32 %v1967, %v1975
    %v1979 = vrot.slane %v1973, 2
    %v1981 = vmul.f32 %v1967, %v1979
    %1983 = vrot.lane.b32.xlu0 %v1981, 96
    %v1984 = vpop.permute.xlu0 %1983
    %v1986 = vadd.f32 %v1977, %v1984
    %v1987 = vtanh.pop %v1986
    %1989 = vrot.lane.b32.xlu0 %v1987, 64
    %v1990 = vpop.permute.xlu0 %1989
    %v1992 = vmul.f32 %v1967, %v1990
    %1994 = vrot.lane.b32.xlu0 %v1992, 96
    %v1995 = vpop.permute.xlu0 %1994
    %vm1997 = vcmask 260102
    %1998 = vst.msk [vmem:[#allocation2] sm:$0x40] %vm1997, %v1995
    %v1999 = vrot.slane %v1992, 6
    %2000 = vrot.lane.b32.xlu0 %v1999, 96
    %v2001 = vpop.permute.xlu0 %2000
    %v2002 = vsel %vm209, %v2001, 0
    %2004 = vmatprep.subr.mxu0 0.0
    %2005 = vmatpush1.msra.mxu0 %v79
    %2006 = vmatprep.subr.mxu0 0.0
    %2007 = vmatpush1.msra.mxu0 %v80
    %2008 = vmatprep.subr.mxu0 0.0
    %2009 = vmatpush1.msra.mxu0 %v81
    %2010 = vmatprep.subr.mxu0 0.0
    %2011 = vmatpush1.msra.mxu0 %v82
    %2012 = vmatprep.subr.mxu0 0.0
    %2013 = vmatpush1.msra.mxu0 0.0
    %2014 = vmatprep.subr.mxu0 0.0
    %2015 = vmatpush1.msra.mxu0 0.0
    %2016 = vmatprep.subr.mxu0 0.0
    %2017 = vmatpush1.msra.mxu0 0.0
    %2018 = vmatprep.subr.mxu0 0.0
    %2019 = vmatpush1.msra.mxu0 0.0
    %2020 = vmatprep.subr.mxu0 0.0
    %2021 = vmatpush1.msra.mxu0 0.0
    %2022 = vmatprep.subr.mxu0 0.0
    %2023 = vmatpush1.msra.mxu0 0.0
    %2024 = vmatprep.subr.mxu0 0.0
    %2025 = vmatpush1.msra.mxu0 0.0
    %2026 = vmatprep.subr.mxu0 0.0
    %2027 = vmatpush1.msra.mxu0 0.0
    %2028 = vmatprep.subr.mxu0 0.0
    %2029 = vmatpush1.msra.mxu0 0.0
    %2030 = vmatprep.subr.mxu0 0.0
    %2031 = vmatpush1.msra.mxu0 0.0
    %2032 = vmatprep.subr.mxu0 0.0
    %2033 = vmatpush1.msra.mxu0 0.0
    %2034 = vmatprep.subr.mxu0 0.0
    %2035 = vmatpush1.msra.mxu0 0.0
    %2036 = vmatprep.subr.mxu0 0.0
    %2037 = vmatpush1.msra.mxu0 0.0
    %2038 = vmatprep.subr.mxu0 0.0
    %2039 = vmatpush1.msra.mxu0 0.0
    %2040 = vmatprep.subr.mxu0 0.0
    %2041 = vmatpush1.msra.mxu0 0.0
    %2042 = vmatprep.subr.mxu0 0.0
    %2043 = vmatpush1.msra.mxu0 0.0
    %2044 = vmatprep.subr.mxu0 0.0
    %2045 = vmatpush1.msra.mxu0 0.0
    %2046 = vmatprep.subr.mxu0 0.0
    %2047 = vmatpush1.msra.mxu0 0.0
    %2048 = vmatprep.subr.mxu0 0.0
    %2049 = vmatpush1.msra.mxu0 0.0
    %2050 = vmatprep.subr.mxu0 0.0
    %2051 = vmatpush1.msra.mxu0 0.0
    %2052 = vmatprep.subr.mxu0 0.0
    %2053 = vmatpush1.msra.mxu0 0.0
    %2054 = vmatprep.subr.mxu0 0.0
    %2055 = vmatpush1.msra.mxu0 0.0
    %2056 = vmatprep.subr.mxu0 0.0
    %2057 = vmatpush1.msra.mxu0 0.0
    %2058 = vmatprep.subr.mxu0 0.0
    %2059 = vmatpush1.msra.mxu0 0.0
    %2060 = vmatprep.subr.mxu0 0.0
    %2061 = vmatpush1.msra.mxu0 0.0
    %2062 = vmatprep.subr.mxu0 0.0
    %2063 = vmatpush1.msra.mxu0 0.0
    %2064 = vmatprep.subr.mxu0 0.0
    %2065 = vmatpush1.msra.mxu0 0.0
    %2066 = vmatprep.subr.mxu0 0.0
    %2067 = vmatpush1.msra.mxu0 0.0
    %2068 = vmatprep.mubr.f32.mxu0 0.0
    %2069 = vmatmul.mubr.f32.gmra.mrb[0].mxu0 %v2002
    %v2070 = vpop.f32.mrb[0].mxu0
    %v2071 = vadd.f32 0.0, %v2070
    %v2072 = vpop.f32.mrb[0].mxu0
    %2073 = vdwg.mxu0
    %v2075 = vrot.slane %v2071, 1
    %v2077 = vadd.f32 %v1220, %v2075
    %v2078 = vmul.f32 %v2077, 0.5
    %v2079 = vtanh.pop %v2078
    %v2080 = vmul.f32 %v2079, 0.5
    %v2081 = vadd.f32 %v2080, 0.5
    %v2082 = vtanh.pop %v2077
    %v2084 = vrot.slane %v2082, 7
    %2086 = vrot.lane.b32.xlu0 %v2084, 64
    %v2087 = vpop.permute.xlu0 %2086
    %v2089 = vrot.slane %v1986, 7
    %v2091 = vmul.f32 %v2081, %v2089
    %v2093 = vrot.slane %v2087, 1
    %v2095 = vmul.f32 %v2081, %v2093
    %2097 = vrot.lane.b32.xlu0 %v2095, 96
    %v2098 = vpop.permute.xlu0 %2097
    %v2100 = vadd.f32 %v2091, %v2098
    %v2101 = vtanh.pop %v2100
    %2103 = vrot.lane.b32.xlu0 %v2101, 64
    %v2104 = vpop.permute.xlu0 %2103
    %v2106 = vmul.f32 %v2081, %v2104
    %2108 = vrot.lane.b32.xlu0 %v2106, 96
    %v2109 = vpop.permute.xlu0 %2108
    %vm2111 = vcmask 261127
    %2112 = vst.msk [vmem:[#allocation2] sm:$0x80] %vm2111, %v2109
    %v2113 = vld [vmem:[#allocation2] sm:$0xff]
    %v2114 = vlaneseq
    %v2115 = vshrl.u32 %v2114, 7
    %v2116 = vsub.s32 0, %v2115
    %v2117 = vrot.slane %v85, %v2116
    %v2119 = vsel %vm209, %v2113, 0
    %2121 = vmatprep.subr.mxu0 0.0
    %2122 = vmatpush1.msra.mxu0 %v86
    %2123 = vmatprep.subr.mxu0 0.0
    %2124 = vmatpush1.msra.mxu0 %v87
    %2125 = vmatprep.subr.mxu0 0.0
    %2126 = vmatpush1.msra.mxu0 %v88
    %2127 = vmatprep.subr.mxu0 0.0
    %2128 = vmatpush1.msra.mxu0 %v89
    %2129 = vmatprep.subr.mxu0 0.0
    %2130 = vmatpush1.msra.mxu0 0.0
    %2131 = vmatprep.subr.mxu0 0.0
    %2132 = vmatpush1.msra.mxu0 0.0
    %2133 = vmatprep.subr.mxu0 0.0
    %2134 = vmatpush1.msra.mxu0 0.0
    %2135 = vmatprep.subr.mxu0 0.0
    %2136 = vmatpush1.msra.mxu0 0.0
    %2137 = vmatprep.subr.mxu0 0.0
    %2138 = vmatpush1.msra.mxu0 0.0
    %2139 = vmatprep.subr.mxu0 0.0
    %2140 = vmatpush1.msra.mxu0 0.0
    %2141 = vmatprep.subr.mxu0 0.0
    %2142 = vmatpush1.msra.mxu0 0.0
    %2143 = vmatprep.subr.mxu0 0.0
    %2144 = vmatpush1.msra.mxu0 0.0
    %2145 = vmatprep.subr.mxu0 0.0
    %2146 = vmatpush1.msra.mxu0 0.0
    %2147 = vmatprep.subr.mxu0 0.0
    %2148 = vmatpush1.msra.mxu0 0.0
    %2149 = vmatprep.subr.mxu0 0.0
    %2150 = vmatpush1.msra.mxu0 0.0
    %2151 = vmatprep.subr.mxu0 0.0
    %2152 = vmatpush1.msra.mxu0 0.0
    %2153 = vmatprep.subr.mxu0 0.0
    %2154 = vmatpush1.msra.mxu0 0.0
    %2155 = vmatprep.subr.mxu0 0.0
    %2156 = vmatpush1.msra.mxu0 0.0
    %2157 = vmatprep.subr.mxu0 0.0
    %2158 = vmatpush1.msra.mxu0 0.0
    %2159 = vmatprep.subr.mxu0 0.0
    %2160 = vmatpush1.msra.mxu0 0.0
    %2161 = vmatprep.subr.mxu0 0.0
    %2162 = vmatpush1.msra.mxu0 0.0
    %2163 = vmatprep.subr.mxu0 0.0
    %2164 = vmatpush1.msra.mxu0 0.0
    %2165 = vmatprep.subr.mxu0 0.0
    %2166 = vmatpush1.msra.mxu0 0.0
    %2167 = vmatprep.subr.mxu0 0.0
    %2168 = vmatpush1.msra.mxu0 0.0
    %2169 = vmatprep.subr.mxu0 0.0
    %2170 = vmatpush1.msra.mxu0 0.0
    %2171 = vmatprep.subr.mxu0 0.0
    %2172 = vmatpush1.msra.mxu0 0.0
    %2173 = vmatprep.subr.mxu0 0.0
    %2174 = vmatpush1.msra.mxu0 0.0
    %2175 = vmatprep.subr.mxu0 0.0
    %2176 = vmatpush1.msra.mxu0 0.0
    %2177 = vmatprep.subr.mxu0 0.0
    %2178 = vmatpush1.msra.mxu0 0.0
    %2179 = vmatprep.subr.mxu0 0.0
    %2180 = vmatpush1.msra.mxu0 0.0
    %2181 = vmatprep.subr.mxu0 0.0
    %2182 = vmatpush1.msra.mxu0 0.0
    %2183 = vmatprep.subr.mxu0 0.0
    %2184 = vmatpush1.msra.mxu0 0.0
    %2185 = vmatprep.mubr.f32.mxu0 0.0
    %2186 = vmatmul.mubr.f32.gmra.mrb[0].mxu0 %v2119
    %v2187 = vpop.f32.mrb[0].mxu0
    %v2188 = vadd.f32 %v2117, %v2187
    %v2189 = vpop.f32.mrb[0].mxu0
    %2190 = vdwg.mxu0
    %v2191 = vmul.f32 %v2188, 0.5
    %v2192 = vtanh.pop %v2191
    %v2193 = vmul.f32 %v2192, 0.5
    %v2194 = vadd.f32 %v2193, 0.5
    %2195 = vst [vmem:[%s2] sm:$0xff] %v2194
    // Predicated region
    $region18: #{_fused_forward.1} parent=1 // pred_check
      _
    $region19: #{_fused_forward.1} parent=1 // pred_check_branch
      %2197 = sbr.rel (0) target = $region21
    $region20: #{_fused_forward.1} parent=1 // pred_region
      _
    $region21: #{_fused_forward.1} parent=1 // pred_fallthru
      _
    // Predicated region
    $region22: #{_fused_forward.1} parent=1 // pred_check
      _
    $region23: #{_fused_forward.1} parent=1 // pred_check_branch
      %2199 = sbr.rel (0) target = $region25
    $region24: #{_fused_forward.1} parent=1 // pred_region
      _
    $region25: #{_fused_forward.1} parent=1 // pred_fallthru
      _
    %2200 = vsyncpa [#allocation4], 1
    %2201 = vsyncpa [#allocation6], 1

</llo_original>
